<compile_context>
chip_gen: v7x
topology: tpu7x:2x2x1
jax: 0.10.0
libtpu: 0.0.40
codegen_flags: <defaults>
</compile_context>

<pallas_src>
import jax
import jax.numpy as jnp
from jax.experimental import pallas as pl
from jax.experimental.pallas import tpu as pltpu

# ---- Config (cfg.*) -------------------------------------------------------
BASE_OUT = 24                 # cfg.out_feauture_BaseModule
COORD = 3                     # cfg.coordinate_feature
CIN = BASE_OUT + COORD        # 27  (input features from BaseModule)
H1, H2 = 32, 48               # conv1 / conv2 output channels
COUT = 64                     # cfg.out_feature_GlobalModule
BN_EPS = 1e-5

# ---- Packed-parameter layout: one [P_ROWS, 128] f32 buffer ----------------
ROW_W1 = 0                    # rows [0,   27)  cols [0, 32)  : W1  [CIN, H1]
ROW_W2 = 32                   # rows [32,  64)  cols [0, 48)  : W2  [H1, H2]
ROW_W3 = 64                   # rows [64, 112)  cols [0, 64)  : W3  [H2, COUT]
ROW_WA = 112                  # row  112        cols [0, 64)  : attn weight
ROW_B1 = 113                  # row  113        cols [0, 32)  : b1
ROW_B2 = 114                  # row  114        cols [0, 48)  : b2
ROW_B3 = 115                  # row  115        cols [0, 64)  : b3
ROW_BA = 116                  # row  116        col  0        : attn bias
P_ROWS = 120                  # padded to a multiple of 8 sublanes
P_COLS = 128                  # one lane tile


# ---- Pallas kernel --------------------------------------------------------
def global_pointnet_kernel(x_ref, p_ref, vec_ref, attw_ref):
    tb, n, cin = x_ref.shape                       # block: [TB, N, CIN]
    x = x_ref[...].reshape(tb * n, cin)            # [TB*N, CIN]

    # static slices into the packed parameter buffer (resident in VMEM)
    w1 = p_ref[ROW_W1:ROW_W1 + CIN, :H1]           # [CIN, H1]
    w2 = p_ref[ROW_W2:ROW_W2 + H1, :H2]            # [H1,  H2]
    w3 = p_ref[ROW_W3:ROW_W3 + H2, :COUT]          # [H2,  COUT]
    wa = p_ref[ROW_WA:ROW_WA + 1, :COUT]           # [1,   COUT]
    b1 = p_ref[ROW_B1:ROW_B1 + 1, :H1]             # [1,   H1]
    b2 = p_ref[ROW_B2:ROW_B2 + 1, :H2]             # [1,   H2]
    b3 = p_ref[ROW_B3:ROW_B3 + 1, :COUT]           # [1,   COUT]
    ba = p_ref[ROW_BA:ROW_BA + 1, 0:1]             # [1,   1]

    # Per-point MLP: three large-M matmuls on the MXU (BN folded into W/b).
    h = jnp.maximum(jnp.dot(x, w1, preferred_element_type=jnp.float32) + b1, 0.0)
    h = jnp.maximum(jnp.dot(h, w2, preferred_element_type=jnp.float32) + b2, 0.0)
    g = jnp.maximum(jnp.dot(h, w3, preferred_element_type=jnp.float32) + b3, 0.0)

    g3 = g.reshape(tb, n, COUT)                    # [TB, N, COUT]

    # Attention logits: VPU multiply + lane reduce (avoids a 1-lane MXU matmul).
    logits = jnp.sum(g3 * wa[None, :, :], axis=-1) + ba      # [TB, N]

    # Softmax over the points axis (per frame).
    m = jnp.max(logits, axis=-1, keepdims=True)
    e = jnp.exp(logits - m)
    s = jnp.sum(e, axis=-1, keepdims=True)
    w = e / s                                                # [TB, N]

    # Attention-weighted pooling over points.
    vec_ref[...] = jnp.sum(g3 * w[:, :, None], axis=1)       # [TB, COUT]
    attw_ref[...] = w                                        # [TB, N] (lane-dense)


# ---- Wrapper --------------------------------------------------------------
def _choose_tb(B, N):
    """Batch-tile size: target ~2048 points per grid step.

    Double-buffered in/out tiles stay at a few MiB, safe under v7x's 64 MiB
    physical VMEM and the smaller scoped defaults of v5e/v6e.  Keeps multiple
    'parallel' grid steps for megacore whenever B is large.
    """
    tb = max(1, 2048 // max(N, 1))
    if tb >= B:
        return B                         # one step: block dim == full array dim
    return max(8, (tb // 8) * 8)         # multiple of 8 for the (8,128) rule


def global_pointnet(x, packed_params, *, tb=None):
    """x: [B, N, CIN] f32 -> (attn_vec [B, COUT], attn_weights [B, N, 1])."""
    B, N, cin = x.shape
    assert cin == CIN, (cin, CIN)

    if tb is None:
        tb = _choose_tb(B, N)
    if tb >= B:
        tb, Bp = B, B
    else:
        Bp = ((B + tb - 1) // tb) * tb
        if Bp != B:                      # pad batch; padded rows are discarded
            x = jnp.concatenate(
                [x, jnp.zeros((Bp - B, N, CIN), x.dtype)], axis=0)

    grid = (Bp // tb,)
    vec, attw = pl.pallas_call(
        global_pointnet_kernel,
        out_shape=(jax.ShapeDtypeStruct((Bp, COUT), jnp.float32),
                   jax.ShapeDtypeStruct((Bp, N), jnp.float32)),
        grid_spec=pltpu.PrefetchScalarGridSpec(
            num_scalar_prefetch=0,
            grid=grid,
            in_specs=[
                pl.BlockSpec((tb, N, CIN), lambda i: (i, 0, 0)),
                pl.BlockSpec((P_ROWS, P_COLS), lambda i: (0, 0)),  # constant block
            ],
            out_specs=[
                pl.BlockSpec((tb, COUT), lambda i: (i, 0)),
                pl.BlockSpec((tb, N), lambda i: (i, 0)),
            ],
        ),
        compiler_params=pltpu.CompilerParams(
            dimension_semantics=("parallel",),
            vmem_limit_bytes=32 * 1024 * 1024,
        ),
        # NOTE: if DMA latency is still exposed at very large N per step, bump
        # the activation BlockSpec to pipeline_mode=pl.Buffered(3).
    )(x, packed_params)

    attn_vec = vec[:B]
    attn_weights = attw[:B].reshape(B, N, 1)   # layout plumbing in the wrapper
    return attn_vec, attn_weights


# ---- Parameter setup (plain JAX glue) -------------------------------------
def fold_conv_bn(w, b, gamma, beta, mean, var, eps=BN_EPS):
    """Fold eval-mode BatchNorm1d into a k=1 Conv1d.

    w: [Cout, Cin] (PyTorch conv1d weight [Cout, Cin, 1] squeezed), b: [Cout].
    Returns W': [Cin, Cout], b': [Cout] so that  y = x @ W' + b'.
    """
    s = gamma / jnp.sqrt(var + eps)
    w_f = (w * s[:, None]).T
    b_f = (b - mean) * s + beta
    return w_f.astype(jnp.float32), b_f.astype(jnp.float32)


def init_params(key):
    dims = [(H1, CIN), (H2, H1), (COUT, H2)]
    params = []
    for i, (cout, cin) in enumerate(dims):
        ks = jax.random.split(jax.random.fold_in(key, i), 6)
        w = 0.1 * jax.random.normal(ks[0], (cout, cin), jnp.float32)
        b = 0.1 * jax.random.normal(ks[1], (cout,), jnp.float32)
        gamma = 1.0 + 0.1 * jax.random.normal(ks[2], (cout,), jnp.float32)
        beta = 0.1 * jax.random.normal(ks[3], (cout,), jnp.float32)
        mean = 0.1 * jax.random.normal(ks[4], (cout,), jnp.float32)
        var = jnp.abs(jax.random.normal(ks[5], (cout,), jnp.float32)) + 0.5
        params.extend(fold_conv_bn(w, b, gamma, beta, mean, var))
    ka, kb = jax.random.split(jax.random.fold_in(key, 99))
    wa = 0.1 * jax.random.normal(ka, (COUT,), jnp.float32)   # Linear(COUT,1).weight[0]
    ba = 0.1 * jax.random.normal(kb, (), jnp.float32)        # Linear(COUT,1).bias[0]
    params.extend([wa, ba])
    return tuple(params)


def pack_params(params):
    """Pack all weights/biases into one (8,128)-aligned VMEM constant."""
    w1, b1, w2, b2, w3, b3, wa, ba = params
    P = jnp.zeros((P_ROWS, P_COLS), jnp.float32)
    P = P.at[ROW_W1:ROW_W1 + CIN, :H1].set(w1)
    P = P.at[ROW_W2:ROW_W2 + H1, :H2].set(w2)
    P = P.at[ROW_W3:ROW_W3 + H2, :COUT].set(w3)
    P = P.at[ROW_WA, :COUT].set(wa)
    P = P.at[ROW_B1, :H1].set(b1)
    P = P.at[ROW_B2, :H2].set(b2)
    P = P.at[ROW_B3, :COUT].set(b3)
    P = P.at[ROW_BA, 0].set(ba)
    return P


# ---- Pure-JAX reference ----------------------------------------------------
def global_pointnet_ref(x, params):
    w1, b1, w2, b2, w3, b3, wa, ba = params
    h = jnp.maximum(x @ w1 + b1, 0.0)
    h = jnp.maximum(h @ w2 + b2, 0.0)
    g = jnp.maximum(h @ w3 + b3, 0.0)                      # [B, N, COUT]
    logits = jnp.einsum('bnc,c->bn', g, wa) + ba
    attw = jax.nn.softmax(logits, axis=1)                  # softmax over points
    attn_vec = jnp.sum(g * attw[..., None], axis=1)
    return attn_vec, attw[..., None]


if __name__ == "__main__":
    key = jax.random.PRNGKey(0)
    kx, kp = jax.random.split(key)

    B, N = 8, 32    # B = batch_size * seq_length, N = n_points
    x = jax.random.normal(kx, (B, N, CIN), jnp.float32)
    params = init_params(kp)
    packed = pack_params(params)

    attn_vec, attn_w = global_pointnet(x, packed)
    attn_vec = jax.block_until_ready(attn_vec)
    attn_w = jax.block_until_ready(attn_w)

    ref_vec, ref_w = global_pointnet_ref(x, params)
    assert attn_vec.shape == (B, COUT), attn_vec.shape
    assert attn_w.shape == (B, N, 1), attn_w.shape
    assert jnp.allclose(attn_vec, ref_vec, atol=1e-4, rtol=1e-4), "attn_vec mismatch"
    assert jnp.allclose(attn_w, ref_w, atol=1e-4, rtol=1e-4), "attn_weights mismatch"

    print("KERNEL_OK")
</pallas_src>

<mosaic_0001>
module attributes {stable_mosaic.version = 11 : i64} {
  func.func @global_pointnet_kernel(%arg0: i32, %arg1: memref<8x32x27xf32, #tpu.memory_space<vmem>>, %arg2: memref<120x128xf32, #tpu.memory_space<vmem>>, %arg3: memref<8x64xf32, #tpu.memory_space<vmem>>, %arg4: memref<8x32xf32, #tpu.memory_space<vmem>>) attributes {dimension_semantics = [#tpu.dimension_semantics<parallel>], iteration_bounds = array<i64: 1>, scalar_prefetch = 0 : i64, scratch_operands = 0 : i64, tpu.core_type = #tpu.core_type<tc>, window_params = [{transform_indices = @transform_0, window_bounds = array<i64: 8, 32, 27>}, {pipeline_mode = #tpu.pipeline_mode<synchronous>, transform_indices = @transform_1, window_bounds = array<i64: 120, 128>}, {transform_indices = @transform_2, window_bounds = array<i64: 8, 64>}, {transform_indices = @transform_3, window_bounds = array<i64: 8, 32>}]} {
    %c0 = arith.constant 0 : index
    %c0_0 = arith.constant 0 : index
    %c0_1 = arith.constant 0 : index
    %0 = vector.load %arg1[%c0, %c0_0, %c0_1] : memref<8x32x27xf32, #tpu.memory_space<vmem>>, vector<8x32x27xf32>
    %1 = vector.shape_cast %0 : vector<8x32x27xf32> to vector<256x27xf32>
    %c0_2 = arith.constant 0 : index
    %c0_3 = arith.constant 0 : index
    %2 = vector.load %arg2[%c0_2, %c0_3] : memref<120x128xf32, #tpu.memory_space<vmem>>, vector<27x32xf32>
    %c32 = arith.constant 32 : index
    %c0_4 = arith.constant 0 : index
    %3 = vector.load %arg2[%c32, %c0_4] : memref<120x128xf32, #tpu.memory_space<vmem>>, vector<32x48xf32>
    %c64 = arith.constant 64 : index
    %c0_5 = arith.constant 0 : index
    %4 = vector.load %arg2[%c64, %c0_5] : memref<120x128xf32, #tpu.memory_space<vmem>>, vector<48x64xf32>
    %c112 = arith.constant 112 : index
    %c0_6 = arith.constant 0 : index
    %5 = vector.load %arg2[%c112, %c0_6] : memref<120x128xf32, #tpu.memory_space<vmem>>, vector<1x64xf32>
    %c113 = arith.constant 113 : index
    %c0_7 = arith.constant 0 : index
    %6 = vector.load %arg2[%c113, %c0_7] : memref<120x128xf32, #tpu.memory_space<vmem>>, vector<1x32xf32>
    %c114 = arith.constant 114 : index
    %c0_8 = arith.constant 0 : index
    %7 = vector.load %arg2[%c114, %c0_8] : memref<120x128xf32, #tpu.memory_space<vmem>>, vector<1x48xf32>
    %c115 = arith.constant 115 : index
    %c0_9 = arith.constant 0 : index
    %8 = vector.load %arg2[%c115, %c0_9] : memref<120x128xf32, #tpu.memory_space<vmem>>, vector<1x64xf32>
    %c116 = arith.constant 116 : index
    %c0_10 = arith.constant 0 : index
    %9 = vector.load %arg2[%c116, %c0_10] : memref<120x128xf32, #tpu.memory_space<vmem>>, vector<1x1xf32>
    %cst = arith.constant dense<0.000000e+00> : vector<256x32xf32>
    %10 = tpu.matmul %1, %2, %cst {dimension_numbers = #tpu.dot_dimension_numbers<[1], [0], [0], [1], [0, 0, 1, 1], [], []>} : vector<256x27xf32>, vector<27x32xf32>, vector<256x32xf32> -> vector<256x32xf32>
    %11 = vector.broadcast %6 : vector<1x32xf32> to vector<256x32xf32>
    %12 = arith.addf %10, %11 : vector<256x32xf32>
    %cst_11 = arith.constant 0.000000e+00 : f32
    %13 = vector.broadcast %cst_11 : f32 to vector<256x32xf32>
    %14 = arith.maximumf %12, %13 : vector<256x32xf32>
    %cst_12 = arith.constant dense<0.000000e+00> : vector<256x48xf32>
    %15 = tpu.matmul %14, %3, %cst_12 {dimension_numbers = #tpu.dot_dimension_numbers<[1], [0], [0], [1], [0, 0, 1, 1], [], []>} : vector<256x32xf32>, vector<32x48xf32>, vector<256x48xf32> -> vector<256x48xf32>
    %16 = vector.broadcast %7 : vector<1x48xf32> to vector<256x48xf32>
    %17 = arith.addf %15, %16 : vector<256x48xf32>
    %cst_13 = arith.constant 0.000000e+00 : f32
    %18 = vector.broadcast %cst_13 : f32 to vector<256x48xf32>
    %19 = arith.maximumf %17, %18 : vector<256x48xf32>
    %cst_14 = arith.constant dense<0.000000e+00> : vector<256x64xf32>
    %20 = tpu.matmul %19, %4, %cst_14 {dimension_numbers = #tpu.dot_dimension_numbers<[1], [0], [0], [1], [0, 0, 1, 1], [], []>} : vector<256x48xf32>, vector<48x64xf32>, vector<256x64xf32> -> vector<256x64xf32>
    %21 = vector.broadcast %8 : vector<1x64xf32> to vector<256x64xf32>
    %22 = arith.addf %20, %21 : vector<256x64xf32>
    %cst_15 = arith.constant 0.000000e+00 : f32
    %23 = vector.broadcast %cst_15 : f32 to vector<256x64xf32>
    %24 = arith.maximumf %22, %23 : vector<256x64xf32>
    %25 = vector.shape_cast %24 : vector<256x64xf32> to vector<8x32x64xf32>
    %26 = vector.shape_cast %5 : vector<1x64xf32> to vector<1x1x64xf32>
    %27 = vector.broadcast %26 : vector<1x1x64xf32> to vector<8x32x64xf32>
    %28 = arith.mulf %25, %27 : vector<8x32x64xf32>
    %cst_16 = arith.constant dense<0.000000e+00> : vector<8x32xf32>
    %29 = vector.multi_reduction <add>, %28, %cst_16 [2] : vector<8x32x64xf32> to vector<8x32xf32>
    %30 = vector.broadcast %9 : vector<1x1xf32> to vector<8x32xf32>
    %31 = arith.addf %29, %30 : vector<8x32xf32>
    %cst_17 = arith.constant dense<0xFF800000> : vector<8xf32>
    %32 = vector.multi_reduction <maximumf>, %31, %cst_17 [1] : vector<8x32xf32> to vector<8xf32>
    %33 = vector.shape_cast %32 : vector<8xf32> to vector<8x1xf32>
    %34 = vector.broadcast %33 : vector<8x1xf32> to vector<8x32xf32>
    %35 = arith.subf %31, %34 : vector<8x32xf32>
    %36 = math.exp %35 : vector<8x32xf32>
    %cst_18 = arith.constant dense<0.000000e+00> : vector<8xf32>
    %37 = vector.multi_reduction <add>, %36, %cst_18 [1] : vector<8x32xf32> to vector<8xf32>
    %38 = vector.shape_cast %37 : vector<8xf32> to vector<8x1xf32>
    %39 = vector.broadcast %38 : vector<8x1xf32> to vector<8x32xf32>
    %40 = arith.divf %36, %39 : vector<8x32xf32>
    %41 = vector.shape_cast %40 : vector<8x32xf32> to vector<8x32x1xf32>
    %42 = vector.broadcast %41 : vector<8x32x1xf32> to vector<8x32x64xf32>
    %43 = arith.mulf %25, %42 : vector<8x32x64xf32>
    %cst_19 = arith.constant dense<0.000000e+00> : vector<8x64xf32>
    %44 = vector.multi_reduction <add>, %43, %cst_19 [1] : vector<8x32x64xf32> to vector<8x64xf32>
    %c0_20 = arith.constant 0 : index
    %c0_21 = arith.constant 0 : index
    %45 = vector.load %arg3[%c0_20, %c0_21] : memref<8x64xf32, #tpu.memory_space<vmem>>, vector<8x64xf32>
    tpu.vector_store %arg3[%c0_20, %c0_21], %44 {strides = array<i32>} : memref<8x64xf32, #tpu.memory_space<vmem>>, vector<8x64xf32>,
    %c0_22 = arith.constant 0 : index
    %c0_23 = arith.constant 0 : index
    %46 = vector.load %arg4[%c0_22, %c0_23] : memref<8x32xf32, #tpu.memory_space<vmem>>, vector<8x32xf32>
    tpu.vector_store %arg4[%c0_22, %c0_23], %40 {strides = array<i32>} : memref<8x32xf32, #tpu.memory_space<vmem>>, vector<8x32xf32>,
    return
  }
  func.func @transform_0(%arg0: i32) -> (i32, i32, i32) {
    %c0_i32 = arith.constant 0 : i32
    %c0_i32_0 = arith.constant 0 : i32
    %c0_i32_1 = arith.constant 0 : i32
    return %arg0, %c0_i32, %c0_i32_0 : i32, i32, i32
  }
  func.func @transform_1(%arg0: i32) -> (i32, i32) {
    %c0_i32 = arith.constant 0 : i32
    %c0_i32_0 = arith.constant 0 : i32
    %c0_i32_1 = arith.constant 0 : i32
    return %c0_i32, %c0_i32_0 : i32, i32
  }
  func.func @transform_2(%arg0: i32) -> (i32, i32) {
    %c0_i32 = arith.constant 0 : i32
    %c0_i32_0 = arith.constant 0 : i32
    return %arg0, %c0_i32 : i32, i32
  }
  func.func @transform_3(%arg0: i32) -> (i32, i32) {
    %c0_i32 = arith.constant 0 : i32
    %c0_i32_0 = arith.constant 0 : i32
    return %arg0, %c0_i32 : i32, i32
  }
}

</mosaic_0001>

<llo_original>
// kernel: tpu_custom_call.1
$region0: #{tpu_custom_call.1}
  #allocation0 [shape = 'u32[]', space=smem, size = 0x4, offset = 0x4, fixed_abs, tag = 'smem constant byte address 0x4 - core index']
  #allocation1 [shape = 'u32[144,128]{1,0:T(1,128)}', space=vmem, size = 0x12000, scoped, tag = 'internal scratch']
  %s0 = inlined_call_operand.vmem [shape: f32[8,32,27], index: 0, kind: input, shape index: {}]
  %s1 = inlined_call_operand.vmem [shape: f32[120,128], index: 1, kind: input, shape index: {}]
  %s2 = inlined_call_operand.hbm [shape: f32[8,64], index: 2, kind: output, shape index: {0}]
  %s3 = inlined_call_operand.hbm [shape: f32[8,32], index: 3, kind: output, shape index: {1}]
  %4 = xla_tuple %s2, %s3
  %s5 = sld [smem:[#allocation0]]
  $region26: #{tpu_custom_call.1} parent=0
    _
  %s7 = ssub.s32 1, %s5
  %s8 = scalar_select 0, %s7, %s5
  $region1: #{tpu_custom_call.1} parent=0
    #allocation2 [shape = 'u8[4096]{0}', space=vmem, size = 0x1000, scoped, tag = 'output window, operand 0, single buffered']
    #allocation3 [shape = 's32[1]{0}', space=sflag, size = 0x4, scoped, tag = 'scoped memory for tpu_custom_call.1']
    #allocation4 [shape = 'u8[4096]{0}', space=vmem, size = 0x1000, scoped, tag = 'output window, operand 1, single buffered']
    #allocation5 [shape = 's32[1]{0}', space=sflag, size = 0x4, scoped, tag = 'scoped memory for tpu_custom_call.1']
    %9 = vsyncpa [#allocation3], 0
    %10 = vsyncpa [#allocation5], 0
    // Predicated region
    $region2: #{tpu_custom_call.1} parent=1 // pred_check
      _
    $region3: #{tpu_custom_call.1} parent=1 // pred_check_branch
      %12 = sbr.rel (0) target = $region5
    $region4: #{tpu_custom_call.1} parent=1 // pred_region
      _
    $region5: #{tpu_custom_call.1} parent=1 // pred_fallthru
      _
    // Predicated region
    $region6: #{tpu_custom_call.1} parent=1 // pred_check
      _
    $region7: #{tpu_custom_call.1} parent=1 // pred_check_branch
      %14 = sbr.rel (0) target = $region9
    $region8: #{tpu_custom_call.1} parent=1 // pred_region
      _
    $region9: #{tpu_custom_call.1} parent=1 // pred_fallthru
      _
    %v15 = vld [vmem:[%s0] sm:$0xff]
    %v16 = vld [vmem:[%s0 + $0x8] sm:$0xff]
    %v17 = vld [vmem:[%s0 + $0x10] sm:$0xff]
    %v18 = vld [vmem:[%s0 + $0x18] sm:$0xff]
    %v19 = vld [vmem:[%s0 + $0x20] sm:$0xff]
    %v20 = vld [vmem:[%s0 + $0x28] sm:$0xff]
    %v21 = vld [vmem:[%s0 + $0x30] sm:$0xff]
    %v22 = vld [vmem:[%s0 + $0x38] sm:$0xff]
    %v23 = vld [vmem:[%s0 + $0x40] sm:$0xff]
    %v24 = vld [vmem:[%s0 + $0x48] sm:$0xff]
    %v25 = vld [vmem:[%s0 + $0x50] sm:$0xff]
    %v26 = vld [vmem:[%s0 + $0x58] sm:$0xff]
    %v27 = vld [vmem:[%s0 + $0x60] sm:$0xff]
    %v28 = vld [vmem:[%s0 + $0x68] sm:$0xff]
    %v29 = vld [vmem:[%s0 + $0x70] sm:$0xff]
    %v30 = vld [vmem:[%s0 + $0x78] sm:$0xff]
    %v31 = vld [vmem:[%s0 + $0x80] sm:$0xff]
    %v32 = vld [vmem:[%s0 + $0x88] sm:$0xff]
    %v33 = vld [vmem:[%s0 + $0x90] sm:$0xff]
    %v34 = vld [vmem:[%s0 + $0x98] sm:$0xff]
    %v35 = vld [vmem:[%s0 + $0xa0] sm:$0xff]
    %v36 = vld [vmem:[%s0 + $0xa8] sm:$0xff]
    %v37 = vld [vmem:[%s0 + $0xb0] sm:$0xff]
    %v38 = vld [vmem:[%s0 + $0xb8] sm:$0xff]
    %v39 = vld [vmem:[%s0 + $0xc0] sm:$0xff]
    %v40 = vld [vmem:[%s0 + $0xc8] sm:$0xff]
    %v41 = vld [vmem:[%s0 + $0xd0] sm:$0xff]
    %v42 = vld [vmem:[%s0 + $0xd8] sm:$0xff]
    %v43 = vld [vmem:[%s0 + $0xe0] sm:$0xff]
    %v44 = vld [vmem:[%s0 + $0xe8] sm:$0xff]
    %v45 = vld [vmem:[%s0 + $0xf0] sm:$0xff]
    %v46 = vld [vmem:[%s0 + $0xf8] sm:$0xff]
    %v47 = vld [vmem:[%s1] sm:$0xff]
    %v48 = vld [vmem:[%s1 + $0x8] sm:$0xff]
    %v49 = vld [vmem:[%s1 + $0x10] sm:$0xff]
    %v50 = vld [vmem:[%s1 + $0x18] sm:$0x7]
    %v51 = vld [vmem:[%s1 + $0x20] sm:$0xff]
    %v52 = vld [vmem:[%s1 + $0x28] sm:$0xff]
    %v53 = vld [vmem:[%s1 + $0x30] sm:$0xff]
    %v54 = vld [vmem:[%s1 + $0x38] sm:$0xff]
    %v55 = vld [vmem:[%s1 + $0x40] sm:$0xff]
    %v56 = vld [vmem:[%s1 + $0x48] sm:$0xff]
    %v57 = vld [vmem:[%s1 + $0x50] sm:$0xff]
    %v58 = vld [vmem:[%s1 + $0x58] sm:$0xff]
    %v59 = vld [vmem:[%s1 + $0x60] sm:$0xff]
    %v60 = vld [vmem:[%s1 + $0x68] sm:$0xff]
    %v61 = vld [vmem:[%s1 + $0x70] sm:$0x1]
    %v62 = vld [vmem:[%s1 + $0x71] sm:$0x1]
    %v63 = vld [vmem:[%s1 + $0x72] sm:$0x1]
    %v64 = vld [vmem:[%s1 + $0x73] sm:$0x1]
    %v65 = vld [vmem:[%s1 + $0x74] sm:$0x1]
    %v66 = vlaneseq
    %v67 = vshrl.u32 %v66, 7
    %v68 = vsub.s32 0, %v67
    %v69 = vrot.slane %v62, %v68
    %vm70 = vcmask 220160
    %v72 = vsel %vm70, %v15, 0
    %v75 = vsel %vm70, %v16, 0
    %v78 = vsel %vm70, %v17, 0
    %v81 = vsel %vm70, %v18, 0
    %v84 = vsel %vm70, %v19, 0
    %v87 = vsel %vm70, %v20, 0
    %v90 = vsel %vm70, %v21, 0
    %v93 = vsel %vm70, %v22, 0
    %v96 = vsel %vm70, %v23, 0
    %v99 = vsel %vm70, %v24, 0
    %v102 = vsel %vm70, %v25, 0
    %v105 = vsel %vm70, %v26, 0
    %v108 = vsel %vm70, %v27, 0
    %v111 = vsel %vm70, %v28, 0
    %v114 = vsel %vm70, %v29, 0
    %v117 = vsel %vm70, %v30, 0
    %v120 = vsel %vm70, %v31, 0
    %v123 = vsel %vm70, %v32, 0
    %v126 = vsel %vm70, %v33, 0
    %v129 = vsel %vm70, %v34, 0
    %v132 = vsel %vm70, %v35, 0
    %v135 = vsel %vm70, %v36, 0
    %v138 = vsel %vm70, %v37, 0
    %v141 = vsel %vm70, %v38, 0
    %v144 = vsel %vm70, %v39, 0
    %v147 = vsel %vm70, %v40, 0
    %v150 = vsel %vm70, %v41, 0
    %v153 = vsel %vm70, %v42, 0
    %v156 = vsel %vm70, %v43, 0
    %v159 = vsel %vm70, %v44, 0
    %v162 = vsel %vm70, %v45, 0
    %v165 = vsel %vm70, %v46, 0
    %vm167 = vcmask 1042432
    %v169 = vsel %vm167, %v50, 0
    %171 = vmatprep.subr.mxu0 0.0
    %172 = vmatpush1.msra.mxu0 %v47
    %173 = vmatprep.subr.mxu0 0.0
    %174 = vmatpush1.msra.mxu0 %v48
    %175 = vmatprep.subr.mxu0 0.0
    %176 = vmatpush1.msra.mxu0 %v49
    %177 = vmatprep.subr.mxu0 0.0
    %178 = vmatpush1.msra.mxu0 %v169
    %179 = vmatprep.subr.mxu0 0.0
    %180 = vmatpush1.msra.mxu0 0.0
    %181 = vmatprep.subr.mxu0 0.0
    %182 = vmatpush1.msra.mxu0 0.0
    %183 = vmatprep.subr.mxu0 0.0
    %184 = vmatpush1.msra.mxu0 0.0
    %185 = vmatprep.subr.mxu0 0.0
    %186 = vmatpush1.msra.mxu0 0.0
    %187 = vmatprep.subr.mxu0 0.0
    %188 = vmatpush1.msra.mxu0 0.0
    %189 = vmatprep.subr.mxu0 0.0
    %190 = vmatpush1.msra.mxu0 0.0
    %191 = vmatprep.subr.mxu0 0.0
    %192 = vmatpush1.msra.mxu0 0.0
    %193 = vmatprep.subr.mxu0 0.0
    %194 = vmatpush1.msra.mxu0 0.0
    %195 = vmatprep.subr.mxu0 0.0
    %196 = vmatpush1.msra.mxu0 0.0
    %197 = vmatprep.subr.mxu0 0.0
    %198 = vmatpush1.msra.mxu0 0.0
    %199 = vmatprep.subr.mxu0 0.0
    %200 = vmatpush1.msra.mxu0 0.0
    %201 = vmatprep.subr.mxu0 0.0
    %202 = vmatpush1.msra.mxu0 0.0
    %203 = vmatprep.subr.mxu0 0.0
    %204 = vmatpush1.msra.mxu0 0.0
    %205 = vmatprep.subr.mxu0 0.0
    %206 = vmatpush1.msra.mxu0 0.0
    %207 = vmatprep.subr.mxu0 0.0
    %208 = vmatpush1.msra.mxu0 0.0
    %209 = vmatprep.subr.mxu0 0.0
    %210 = vmatpush1.msra.mxu0 0.0
    %211 = vmatprep.subr.mxu0 0.0
    %212 = vmatpush1.msra.mxu0 0.0
    %213 = vmatprep.subr.mxu0 0.0
    %214 = vmatpush1.msra.mxu0 0.0
    %215 = vmatprep.subr.mxu0 0.0
    %216 = vmatpush1.msra.mxu0 0.0
    %217 = vmatprep.subr.mxu0 0.0
    %218 = vmatpush1.msra.mxu0 0.0
    %219 = vmatprep.subr.mxu0 0.0
    %220 = vmatpush1.msra.mxu0 0.0
    %221 = vmatprep.subr.mxu0 0.0
    %222 = vmatpush1.msra.mxu0 0.0
    %223 = vmatprep.subr.mxu0 0.0
    %224 = vmatpush1.msra.mxu0 0.0
    %225 = vmatprep.subr.mxu0 0.0
    %226 = vmatpush1.msra.mxu0 0.0
    %227 = vmatprep.subr.mxu0 0.0
    %228 = vmatpush1.msra.mxu0 0.0
    %229 = vmatprep.subr.mxu0 0.0
    %230 = vmatpush1.msra.mxu0 0.0
    %231 = vmatprep.subr.mxu0 0.0
    %232 = vmatpush1.msra.mxu0 0.0
    %233 = vmatprep.subr.mxu0 0.0
    %234 = vmatpush1.msra.mxu0 0.0
    %235 = vmatprep.mubr.f32.mxu0 0.0
    %236 = vmatmul.mubr.f32.gmra.mrb[0].mxu0 %v72
    %v237 = vpop.f32.mrb[0].mxu0
    %v238 = vadd.f32 %v69, %v237
    %v239 = vpop.f32.mrb[0].mxu0
    %240 = vmatprep.mubr.f32.mxu0 0.0
    %241 = vmatmul.mubr.f32.gmra.mrb[0].mxu0 %v75
    %v242 = vpop.f32.mrb[0].mxu0
    %v243 = vadd.f32 %v69, %v242
    %v244 = vpop.f32.mrb[0].mxu0
    %245 = vmatprep.mubr.f32.mxu0 0.0
    %246 = vmatmul.mubr.f32.gmra.mrb[0].mxu0 %v78
    %v247 = vpop.f32.mrb[0].mxu0
    %v248 = vadd.f32 %v69, %v247
    %v249 = vpop.f32.mrb[0].mxu0
    %250 = vmatprep.mubr.f32.mxu0 0.0
    %251 = vmatmul.mubr.f32.gmra.mrb[0].mxu0 %v81
    %v252 = vpop.f32.mrb[0].mxu0
    %v253 = vadd.f32 %v69, %v252
    %v254 = vpop.f32.mrb[0].mxu0
    %255 = vmatprep.mubr.f32.mxu0 0.0
    %256 = vmatmul.mubr.f32.gmra.mrb[0].mxu0 %v84
    %v257 = vpop.f32.mrb[0].mxu0
    %v258 = vadd.f32 %v69, %v257
    %v259 = vpop.f32.mrb[0].mxu0
    %260 = vmatprep.mubr.f32.mxu0 0.0
    %261 = vmatmul.mubr.f32.gmra.mrb[0].mxu0 %v87
    %v262 = vpop.f32.mrb[0].mxu0
    %v263 = vadd.f32 %v69, %v262
    %v264 = vpop.f32.mrb[0].mxu0
    %265 = vmatprep.mubr.f32.mxu0 0.0
    %266 = vmatmul.mubr.f32.gmra.mrb[0].mxu0 %v90
    %v267 = vpop.f32.mrb[0].mxu0
    %v268 = vadd.f32 %v69, %v267
    %v269 = vpop.f32.mrb[0].mxu0
    %270 = vmatprep.mubr.f32.mxu0 0.0
    %271 = vmatmul.mubr.f32.gmra.mrb[0].mxu0 %v93
    %v272 = vpop.f32.mrb[0].mxu0
    %v273 = vadd.f32 %v69, %v272
    %v274 = vpop.f32.mrb[0].mxu0
    %275 = vmatprep.mubr.f32.mxu0 0.0
    %276 = vmatmul.mubr.f32.gmra.mrb[0].mxu0 %v96
    %v277 = vpop.f32.mrb[0].mxu0
    %v278 = vadd.f32 %v69, %v277
    %v279 = vpop.f32.mrb[0].mxu0
    %280 = vmatprep.mubr.f32.mxu0 0.0
    %281 = vmatmul.mubr.f32.gmra.mrb[0].mxu0 %v99
    %v282 = vpop.f32.mrb[0].mxu0
    %v283 = vadd.f32 %v69, %v282
    %v284 = vpop.f32.mrb[0].mxu0
    %285 = vmatprep.mubr.f32.mxu0 0.0
    %286 = vmatmul.mubr.f32.gmra.mrb[0].mxu0 %v102
    %v287 = vpop.f32.mrb[0].mxu0
    %v288 = vadd.f32 %v69, %v287
    %v289 = vpop.f32.mrb[0].mxu0
    %290 = vmatprep.mubr.f32.mxu0 0.0
    %291 = vmatmul.mubr.f32.gmra.mrb[0].mxu0 %v105
    %v292 = vpop.f32.mrb[0].mxu0
    %v293 = vadd.f32 %v69, %v292
    %v294 = vpop.f32.mrb[0].mxu0
    %295 = vmatprep.mubr.f32.mxu0 0.0
    %296 = vmatmul.mubr.f32.gmra.mrb[0].mxu0 %v108
    %v297 = vpop.f32.mrb[0].mxu0
    %v298 = vadd.f32 %v69, %v297
    %v299 = vpop.f32.mrb[0].mxu0
    %300 = vmatprep.mubr.f32.mxu0 0.0
    %301 = vmatmul.mubr.f32.gmra.mrb[0].mxu0 %v111
    %v302 = vpop.f32.mrb[0].mxu0
    %v303 = vadd.f32 %v69, %v302
    %v304 = vpop.f32.mrb[0].mxu0
    %305 = vmatprep.mubr.f32.mxu0 0.0
    %306 = vmatmul.mubr.f32.gmra.mrb[0].mxu0 %v114
    %v307 = vpop.f32.mrb[0].mxu0
    %v308 = vadd.f32 %v69, %v307
    %v309 = vpop.f32.mrb[0].mxu0
    %310 = vmatprep.mubr.f32.mxu0 0.0
    %311 = vmatmul.mubr.f32.gmra.mrb[0].mxu0 %v117
    %v312 = vpop.f32.mrb[0].mxu0
    %v313 = vadd.f32 %v69, %v312
    %v314 = vpop.f32.mrb[0].mxu0
    %315 = vmatprep.mubr.f32.mxu0 0.0
    %316 = vmatmul.mubr.f32.gmra.mrb[0].mxu0 %v120
    %v317 = vpop.f32.mrb[0].mxu0
    %v318 = vadd.f32 %v69, %v317
    %v319 = vpop.f32.mrb[0].mxu0
    %320 = vmatprep.mubr.f32.mxu0 0.0
    %321 = vmatmul.mubr.f32.gmra.mrb[0].mxu0 %v123
    %v322 = vpop.f32.mrb[0].mxu0
    %v323 = vadd.f32 %v69, %v322
    %v324 = vpop.f32.mrb[0].mxu0
    %325 = vmatprep.mubr.f32.mxu0 0.0
    %326 = vmatmul.mubr.f32.gmra.mrb[0].mxu0 %v126
    %v327 = vpop.f32.mrb[0].mxu0
    %v328 = vadd.f32 %v69, %v327
    %v329 = vpop.f32.mrb[0].mxu0
    %330 = vmatprep.mubr.f32.mxu0 0.0
    %331 = vmatmul.mubr.f32.gmra.mrb[0].mxu0 %v129
    %v332 = vpop.f32.mrb[0].mxu0
    %v333 = vadd.f32 %v69, %v332
    %v334 = vpop.f32.mrb[0].mxu0
    %335 = vmatprep.mubr.f32.mxu0 0.0
    %336 = vmatmul.mubr.f32.gmra.mrb[0].mxu0 %v132
    %v337 = vpop.f32.mrb[0].mxu0
    %v338 = vadd.f32 %v69, %v337
    %v339 = vpop.f32.mrb[0].mxu0
    %340 = vmatprep.mubr.f32.mxu0 0.0
    %341 = vmatmul.mubr.f32.gmra.mrb[0].mxu0 %v135
    %v342 = vpop.f32.mrb[0].mxu0
    %v343 = vadd.f32 %v69, %v342
    %v344 = vpop.f32.mrb[0].mxu0
    %345 = vmatprep.mubr.f32.mxu0 0.0
    %346 = vmatmul.mubr.f32.gmra.mrb[0].mxu0 %v138
    %v347 = vpop.f32.mrb[0].mxu0
    %v348 = vadd.f32 %v69, %v347
    %v349 = vpop.f32.mrb[0].mxu0
    %350 = vmatprep.mubr.f32.mxu0 0.0
    %351 = vmatmul.mubr.f32.gmra.mrb[0].mxu0 %v141
    %v352 = vpop.f32.mrb[0].mxu0
    %v353 = vadd.f32 %v69, %v352
    %v354 = vpop.f32.mrb[0].mxu0
    %355 = vmatprep.mubr.f32.mxu0 0.0
    %356 = vmatmul.mubr.f32.gmra.mrb[0].mxu0 %v144
    %v357 = vpop.f32.mrb[0].mxu0
    %v358 = vadd.f32 %v69, %v357
    %v359 = vpop.f32.mrb[0].mxu0
    %360 = vmatprep.mubr.f32.mxu0 0.0
    %361 = vmatmul.mubr.f32.gmra.mrb[0].mxu0 %v147
    %v362 = vpop.f32.mrb[0].mxu0
    %v363 = vadd.f32 %v69, %v362
    %v364 = vpop.f32.mrb[0].mxu0
    %365 = vmatprep.mubr.f32.mxu0 0.0
    %366 = vmatmul.mubr.f32.gmra.mrb[0].mxu0 %v150
    %v367 = vpop.f32.mrb[0].mxu0
    %v368 = vadd.f32 %v69, %v367
    %v369 = vpop.f32.mrb[0].mxu0
    %370 = vmatprep.mubr.f32.mxu0 0.0
    %371 = vmatmul.mubr.f32.gmra.mrb[0].mxu0 %v153
    %v372 = vpop.f32.mrb[0].mxu0
    %v373 = vadd.f32 %v69, %v372
    %v374 = vpop.f32.mrb[0].mxu0
    %375 = vmatprep.mubr.f32.mxu0 0.0
    %376 = vmatmul.mubr.f32.gmra.mrb[0].mxu0 %v156
    %v377 = vpop.f32.mrb[0].mxu0
    %v378 = vadd.f32 %v69, %v377
    %v379 = vpop.f32.mrb[0].mxu0
    %380 = vmatprep.mubr.f32.mxu0 0.0
    %381 = vmatmul.mubr.f32.gmra.mrb[0].mxu0 %v159
    %v382 = vpop.f32.mrb[0].mxu0
    %v383 = vadd.f32 %v69, %v382
    %v384 = vpop.f32.mrb[0].mxu0
    %385 = vmatprep.mubr.f32.mxu0 0.0
    %386 = vmatmul.mubr.f32.gmra.mrb[0].mxu0 %v162
    %v387 = vpop.f32.mrb[0].mxu0
    %v388 = vadd.f32 %v69, %v387
    %v389 = vpop.f32.mrb[0].mxu0
    %390 = vmatprep.mubr.f32.mxu0 0.0
    %391 = vmatmul.mubr.f32.gmra.mrb[0].mxu0 %v165
    %v392 = vpop.f32.mrb[0].mxu0
    %v393 = vadd.f32 %v69, %v392
    %v394 = vpop.f32.mrb[0].mxu0
    %395 = vdwg.mxu0
    %v396 = vmax.f32 %v238, 0.0
    %v397 = vmax.f32 %v243, 0.0
    %v398 = vmax.f32 %v248, 0.0
    %v399 = vmax.f32 %v253, 0.0
    %v400 = vmax.f32 %v258, 0.0
    %v401 = vmax.f32 %v263, 0.0
    %v402 = vmax.f32 %v268, 0.0
    %v403 = vmax.f32 %v273, 0.0
    %v404 = vmax.f32 %v278, 0.0
    %v405 = vmax.f32 %v283, 0.0
    %v406 = vmax.f32 %v288, 0.0
    %v407 = vmax.f32 %v293, 0.0
    %v408 = vmax.f32 %v298, 0.0
    %v409 = vmax.f32 %v303, 0.0
    %v410 = vmax.f32 %v308, 0.0
    %v411 = vmax.f32 %v313, 0.0
    %v412 = vmax.f32 %v318, 0.0
    %v413 = vmax.f32 %v323, 0.0
    %v414 = vmax.f32 %v328, 0.0
    %v415 = vmax.f32 %v333, 0.0
    %v416 = vmax.f32 %v338, 0.0
    %v417 = vmax.f32 %v343, 0.0
    %v418 = vmax.f32 %v348, 0.0
    %v419 = vmax.f32 %v353, 0.0
    %v420 = vmax.f32 %v358, 0.0
    %v421 = vmax.f32 %v363, 0.0
    %v422 = vmax.f32 %v368, 0.0
    %v423 = vmax.f32 %v373, 0.0
    %v424 = vmax.f32 %v378, 0.0
    %v425 = vmax.f32 %v383, 0.0
    %v426 = vmax.f32 %v388, 0.0
    %v427 = vmax.f32 %v393, 0.0
    %v428 = vlaneseq
    %v429 = vshrl.u32 %v428, 7
    %v430 = vsub.s32 0, %v429
    %v431 = vrot.slane %v63, %v430
    %vm432 = vcmask 261120
    %v434 = vsel %vm432, %v396, 0
    %v437 = vsel %vm432, %v397, 0
    %v440 = vsel %vm432, %v398, 0
    %v443 = vsel %vm432, %v399, 0
    %v446 = vsel %vm432, %v400, 0
    %v449 = vsel %vm432, %v401, 0
    %v452 = vsel %vm432, %v402, 0
    %v455 = vsel %vm432, %v403, 0
    %v458 = vsel %vm432, %v404, 0
    %v461 = vsel %vm432, %v405, 0
    %v464 = vsel %vm432, %v406, 0
    %v467 = vsel %vm432, %v407, 0
    %v470 = vsel %vm432, %v408, 0
    %v473 = vsel %vm432, %v409, 0
    %v476 = vsel %vm432, %v410, 0
    %v479 = vsel %vm432, %v411, 0
    %v482 = vsel %vm432, %v412, 0
    %v485 = vsel %vm432, %v413, 0
    %v488 = vsel %vm432, %v414, 0
    %v491 = vsel %vm432, %v415, 0
    %v494 = vsel %vm432, %v416, 0
    %v497 = vsel %vm432, %v417, 0
    %v500 = vsel %vm432, %v418, 0
    %v503 = vsel %vm432, %v419, 0
    %v506 = vsel %vm432, %v420, 0
    %v509 = vsel %vm432, %v421, 0
    %v512 = vsel %vm432, %v422, 0
    %v515 = vsel %vm432, %v423, 0
    %v518 = vsel %vm432, %v424, 0
    %v521 = vsel %vm432, %v425, 0
    %v524 = vsel %vm432, %v426, 0
    %v527 = vsel %vm432, %v427, 0
    %529 = vmatprep.subr.mxu0 0.0
    %530 = vmatpush1.msra.mxu0 %v51
    %531 = vmatprep.subr.mxu0 0.0
    %532 = vmatpush1.msra.mxu0 %v52
    %533 = vmatprep.subr.mxu0 0.0
    %534 = vmatpush1.msra.mxu0 %v53
    %535 = vmatprep.subr.mxu0 0.0
    %536 = vmatpush1.msra.mxu0 %v54
    %537 = vmatprep.subr.mxu0 0.0
    %538 = vmatpush1.msra.mxu0 0.0
    %539 = vmatprep.subr.mxu0 0.0
    %540 = vmatpush1.msra.mxu0 0.0
    %541 = vmatprep.subr.mxu0 0.0
    %542 = vmatpush1.msra.mxu0 0.0
    %543 = vmatprep.subr.mxu0 0.0
    %544 = vmatpush1.msra.mxu0 0.0
    %545 = vmatprep.subr.mxu0 0.0
    %546 = vmatpush1.msra.mxu0 0.0
    %547 = vmatprep.subr.mxu0 0.0
    %548 = vmatpush1.msra.mxu0 0.0
    %549 = vmatprep.subr.mxu0 0.0
    %550 = vmatpush1.msra.mxu0 0.0
    %551 = vmatprep.subr.mxu0 0.0
    %552 = vmatpush1.msra.mxu0 0.0
    %553 = vmatprep.subr.mxu0 0.0
    %554 = vmatpush1.msra.mxu0 0.0
    %555 = vmatprep.subr.mxu0 0.0
    %556 = vmatpush1.msra.mxu0 0.0
    %557 = vmatprep.subr.mxu0 0.0
    %558 = vmatpush1.msra.mxu0 0.0
    %559 = vmatprep.subr.mxu0 0.0
    %560 = vmatpush1.msra.mxu0 0.0
    %561 = vmatprep.subr.mxu0 0.0
    %562 = vmatpush1.msra.mxu0 0.0
    %563 = vmatprep.subr.mxu0 0.0
    %564 = vmatpush1.msra.mxu0 0.0
    %565 = vmatprep.subr.mxu0 0.0
    %566 = vmatpush1.msra.mxu0 0.0
    %567 = vmatprep.subr.mxu0 0.0
    %568 = vmatpush1.msra.mxu0 0.0
    %569 = vmatprep.subr.mxu0 0.0
    %570 = vmatpush1.msra.mxu0 0.0
    %571 = vmatprep.subr.mxu0 0.0
    %572 = vmatpush1.msra.mxu0 0.0
    %573 = vmatprep.subr.mxu0 0.0
    %574 = vmatpush1.msra.mxu0 0.0
    %575 = vmatprep.subr.mxu0 0.0
    %576 = vmatpush1.msra.mxu0 0.0
    %577 = vmatprep.subr.mxu0 0.0
    %578 = vmatpush1.msra.mxu0 0.0
    %579 = vmatprep.subr.mxu0 0.0
    %580 = vmatpush1.msra.mxu0 0.0
    %581 = vmatprep.subr.mxu0 0.0
    %582 = vmatpush1.msra.mxu0 0.0
    %583 = vmatprep.subr.mxu0 0.0
    %584 = vmatpush1.msra.mxu0 0.0
    %585 = vmatprep.subr.mxu0 0.0
    %586 = vmatpush1.msra.mxu0 0.0
    %587 = vmatprep.subr.mxu0 0.0
    %588 = vmatpush1.msra.mxu0 0.0
    %589 = vmatprep.subr.mxu0 0.0
    %590 = vmatpush1.msra.mxu0 0.0
    %591 = vmatprep.subr.mxu0 0.0
    %592 = vmatpush1.msra.mxu0 0.0
    %593 = vmatprep.mubr.f32.mxu0 0.0
    %594 = vmatmul.mubr.f32.gmra.mrb[0].mxu0 %v434
    %v595 = vpop.f32.mrb[0].mxu0
    %v596 = vadd.f32 %v431, %v595
    %v597 = vpop.f32.mrb[0].mxu0
    %598 = vmatprep.mubr.f32.mxu0 0.0
    %599 = vmatmul.mubr.f32.gmra.mrb[0].mxu0 %v437
    %v600 = vpop.f32.mrb[0].mxu0
    %v601 = vadd.f32 %v431, %v600
    %v602 = vpop.f32.mrb[0].mxu0
    %603 = vmatprep.mubr.f32.mxu0 0.0
    %604 = vmatmul.mubr.f32.gmra.mrb[0].mxu0 %v440
    %v605 = vpop.f32.mrb[0].mxu0
    %v606 = vadd.f32 %v431, %v605
    %v607 = vpop.f32.mrb[0].mxu0
    %608 = vmatprep.mubr.f32.mxu0 0.0
    %609 = vmatmul.mubr.f32.gmra.mrb[0].mxu0 %v443
    %v610 = vpop.f32.mrb[0].mxu0
    %v611 = vadd.f32 %v431, %v610
    %v612 = vpop.f32.mrb[0].mxu0
    %613 = vmatprep.mubr.f32.mxu0 0.0
    %614 = vmatmul.mubr.f32.gmra.mrb[0].mxu0 %v446
    %v615 = vpop.f32.mrb[0].mxu0
    %v616 = vadd.f32 %v431, %v615
    %v617 = vpop.f32.mrb[0].mxu0
    %618 = vmatprep.mubr.f32.mxu0 0.0
    %619 = vmatmul.mubr.f32.gmra.mrb[0].mxu0 %v449
    %v620 = vpop.f32.mrb[0].mxu0
    %v621 = vadd.f32 %v431, %v620
    %v622 = vpop.f32.mrb[0].mxu0
    %623 = vmatprep.mubr.f32.mxu0 0.0
    %624 = vmatmul.mubr.f32.gmra.mrb[0].mxu0 %v452
    %v625 = vpop.f32.mrb[0].mxu0
    %v626 = vadd.f32 %v431, %v625
    %v627 = vpop.f32.mrb[0].mxu0
    %628 = vmatprep.mubr.f32.mxu0 0.0
    %629 = vmatmul.mubr.f32.gmra.mrb[0].mxu0 %v455
    %v630 = vpop.f32.mrb[0].mxu0
    %v631 = vadd.f32 %v431, %v630
    %v632 = vpop.f32.mrb[0].mxu0
    %633 = vmatprep.mubr.f32.mxu0 0.0
    %634 = vmatmul.mubr.f32.gmra.mrb[0].mxu0 %v458
    %v635 = vpop.f32.mrb[0].mxu0
    %v636 = vadd.f32 %v431, %v635
    %v637 = vpop.f32.mrb[0].mxu0
    %638 = vmatprep.mubr.f32.mxu0 0.0
    %639 = vmatmul.mubr.f32.gmra.mrb[0].mxu0 %v461
    %v640 = vpop.f32.mrb[0].mxu0
    %v641 = vadd.f32 %v431, %v640
    %v642 = vpop.f32.mrb[0].mxu0
    %643 = vmatprep.mubr.f32.mxu0 0.0
    %644 = vmatmul.mubr.f32.gmra.mrb[0].mxu0 %v464
    %v645 = vpop.f32.mrb[0].mxu0
    %v646 = vadd.f32 %v431, %v645
    %v647 = vpop.f32.mrb[0].mxu0
    %648 = vmatprep.mubr.f32.mxu0 0.0
    %649 = vmatmul.mubr.f32.gmra.mrb[0].mxu0 %v467
    %v650 = vpop.f32.mrb[0].mxu0
    %v651 = vadd.f32 %v431, %v650
    %v652 = vpop.f32.mrb[0].mxu0
    %653 = vmatprep.mubr.f32.mxu0 0.0
    %654 = vmatmul.mubr.f32.gmra.mrb[0].mxu0 %v470
    %v655 = vpop.f32.mrb[0].mxu0
    %v656 = vadd.f32 %v431, %v655
    %v657 = vpop.f32.mrb[0].mxu0
    %658 = vmatprep.mubr.f32.mxu0 0.0
    %659 = vmatmul.mubr.f32.gmra.mrb[0].mxu0 %v473
    %v660 = vpop.f32.mrb[0].mxu0
    %v661 = vadd.f32 %v431, %v660
    %v662 = vpop.f32.mrb[0].mxu0
    %663 = vmatprep.mubr.f32.mxu0 0.0
    %664 = vmatmul.mubr.f32.gmra.mrb[0].mxu0 %v476
    %v665 = vpop.f32.mrb[0].mxu0
    %v666 = vadd.f32 %v431, %v665
    %v667 = vpop.f32.mrb[0].mxu0
    %668 = vmatprep.mubr.f32.mxu0 0.0
    %669 = vmatmul.mubr.f32.gmra.mrb[0].mxu0 %v479
    %v670 = vpop.f32.mrb[0].mxu0
    %v671 = vadd.f32 %v431, %v670
    %v672 = vpop.f32.mrb[0].mxu0
    %673 = vmatprep.mubr.f32.mxu0 0.0
    %674 = vmatmul.mubr.f32.gmra.mrb[0].mxu0 %v482
    %v675 = vpop.f32.mrb[0].mxu0
    %v676 = vadd.f32 %v431, %v675
    %v677 = vpop.f32.mrb[0].mxu0
    %678 = vmatprep.mubr.f32.mxu0 0.0
    %679 = vmatmul.mubr.f32.gmra.mrb[0].mxu0 %v485
    %v680 = vpop.f32.mrb[0].mxu0
    %v681 = vadd.f32 %v431, %v680
    %v682 = vpop.f32.mrb[0].mxu0
    %683 = vmatprep.mubr.f32.mxu0 0.0
    %684 = vmatmul.mubr.f32.gmra.mrb[0].mxu0 %v488
    %v685 = vpop.f32.mrb[0].mxu0
    %v686 = vadd.f32 %v431, %v685
    %v687 = vpop.f32.mrb[0].mxu0
    %688 = vmatprep.mubr.f32.mxu0 0.0
    %689 = vmatmul.mubr.f32.gmra.mrb[0].mxu0 %v491
    %v690 = vpop.f32.mrb[0].mxu0
    %v691 = vadd.f32 %v431, %v690
    %v692 = vpop.f32.mrb[0].mxu0
    %693 = vmatprep.mubr.f32.mxu0 0.0
    %694 = vmatmul.mubr.f32.gmra.mrb[0].mxu0 %v494
    %v695 = vpop.f32.mrb[0].mxu0
    %v696 = vadd.f32 %v431, %v695
    %v697 = vpop.f32.mrb[0].mxu0
    %698 = vmatprep.mubr.f32.mxu0 0.0
    %699 = vmatmul.mubr.f32.gmra.mrb[0].mxu0 %v497
    %v700 = vpop.f32.mrb[0].mxu0
    %v701 = vadd.f32 %v431, %v700
    %v702 = vpop.f32.mrb[0].mxu0
    %703 = vmatprep.mubr.f32.mxu0 0.0
    %704 = vmatmul.mubr.f32.gmra.mrb[0].mxu0 %v500
    %v705 = vpop.f32.mrb[0].mxu0
    %v706 = vadd.f32 %v431, %v705
    %v707 = vpop.f32.mrb[0].mxu0
    %708 = vmatprep.mubr.f32.mxu0 0.0
    %709 = vmatmul.mubr.f32.gmra.mrb[0].mxu0 %v503
    %v710 = vpop.f32.mrb[0].mxu0
    %v711 = vadd.f32 %v431, %v710
    %v712 = vpop.f32.mrb[0].mxu0
    %713 = vmatprep.mubr.f32.mxu0 0.0
    %714 = vmatmul.mubr.f32.gmra.mrb[0].mxu0 %v506
    %v715 = vpop.f32.mrb[0].mxu0
    %v716 = vadd.f32 %v431, %v715
    %v717 = vpop.f32.mrb[0].mxu0
    %718 = vmatprep.mubr.f32.mxu0 0.0
    %719 = vmatmul.mubr.f32.gmra.mrb[0].mxu0 %v509
    %v720 = vpop.f32.mrb[0].mxu0
    %v721 = vadd.f32 %v431, %v720
    %v722 = vpop.f32.mrb[0].mxu0
    %723 = vmatprep.mubr.f32.mxu0 0.0
    %724 = vmatmul.mubr.f32.gmra.mrb[0].mxu0 %v512
    %v725 = vpop.f32.mrb[0].mxu0
    %v726 = vadd.f32 %v431, %v725
    %v727 = vpop.f32.mrb[0].mxu0
    %728 = vmatprep.mubr.f32.mxu0 0.0
    %729 = vmatmul.mubr.f32.gmra.mrb[0].mxu0 %v515
    %v730 = vpop.f32.mrb[0].mxu0
    %v731 = vadd.f32 %v431, %v730
    %v732 = vpop.f32.mrb[0].mxu0
    %733 = vmatprep.mubr.f32.mxu0 0.0
    %734 = vmatmul.mubr.f32.gmra.mrb[0].mxu0 %v518
    %v735 = vpop.f32.mrb[0].mxu0
    %v736 = vadd.f32 %v431, %v735
    %v737 = vpop.f32.mrb[0].mxu0
    %738 = vmatprep.mubr.f32.mxu0 0.0
    %739 = vmatmul.mubr.f32.gmra.mrb[0].mxu0 %v521
    %v740 = vpop.f32.mrb[0].mxu0
    %v741 = vadd.f32 %v431, %v740
    %v742 = vpop.f32.mrb[0].mxu0
    %743 = vmatprep.mubr.f32.mxu0 0.0
    %744 = vmatmul.mubr.f32.gmra.mrb[0].mxu0 %v524
    %v745 = vpop.f32.mrb[0].mxu0
    %v746 = vadd.f32 %v431, %v745
    %v747 = vpop.f32.mrb[0].mxu0
    %748 = vmatprep.mubr.f32.mxu0 0.0
    %749 = vmatmul.mubr.f32.gmra.mrb[0].mxu0 %v527
    %v750 = vpop.f32.mrb[0].mxu0
    %v751 = vadd.f32 %v431, %v750
    %v752 = vpop.f32.mrb[0].mxu0
    %753 = vdwg.mxu0
    %v754 = vmax.f32 %v596, 0.0
    %v755 = vmax.f32 %v601, 0.0
    %v756 = vmax.f32 %v606, 0.0
    %v757 = vmax.f32 %v611, 0.0
    %v758 = vmax.f32 %v616, 0.0
    %v759 = vmax.f32 %v621, 0.0
    %v760 = vmax.f32 %v626, 0.0
    %v761 = vmax.f32 %v631, 0.0
    %v762 = vmax.f32 %v636, 0.0
    %v763 = vmax.f32 %v641, 0.0
    %v764 = vmax.f32 %v646, 0.0
    %v765 = vmax.f32 %v651, 0.0
    %v766 = vmax.f32 %v656, 0.0
    %v767 = vmax.f32 %v661, 0.0
    %v768 = vmax.f32 %v666, 0.0
    %v769 = vmax.f32 %v671, 0.0
    %v770 = vmax.f32 %v676, 0.0
    %v771 = vmax.f32 %v681, 0.0
    %v772 = vmax.f32 %v686, 0.0
    %v773 = vmax.f32 %v691, 0.0
    %v774 = vmax.f32 %v696, 0.0
    %v775 = vmax.f32 %v701, 0.0
    %v776 = vmax.f32 %v706, 0.0
    %v777 = vmax.f32 %v711, 0.0
    %v778 = vmax.f32 %v716, 0.0
    %v779 = vmax.f32 %v721, 0.0
    %v780 = vmax.f32 %v726, 0.0
    %v781 = vmax.f32 %v731, 0.0
    %v782 = vmax.f32 %v736, 0.0
    %v783 = vmax.f32 %v741, 0.0
    %v784 = vmax.f32 %v746, 0.0
    %v785 = vmax.f32 %v751, 0.0
    %v786 = vlaneseq
    %v787 = vshrl.u32 %v786, 7
    %v788 = vsub.s32 0, %v787
    %v789 = vrot.slane %v64, %v788
    %vm790 = vcmask 392192
    %v792 = vsel %vm790, %v754, 0
    %v795 = vsel %vm790, %v755, 0
    %v798 = vsel %vm790, %v756, 0
    %v801 = vsel %vm790, %v757, 0
    %v804 = vsel %vm790, %v758, 0
    %v807 = vsel %vm790, %v759, 0
    %v810 = vsel %vm790, %v760, 0
    %v813 = vsel %vm790, %v761, 0
    %v816 = vsel %vm790, %v762, 0
    %v819 = vsel %vm790, %v763, 0
    %v822 = vsel %vm790, %v764, 0
    %v825 = vsel %vm790, %v765, 0
    %v828 = vsel %vm790, %v766, 0
    %v831 = vsel %vm790, %v767, 0
    %v834 = vsel %vm790, %v768, 0
    %v837 = vsel %vm790, %v769, 0
    %v840 = vsel %vm790, %v770, 0
    %v843 = vsel %vm790, %v771, 0
    %v846 = vsel %vm790, %v772, 0
    %v849 = vsel %vm790, %v773, 0
    %v852 = vsel %vm790, %v774, 0
    %v855 = vsel %vm790, %v775, 0
    %v858 = vsel %vm790, %v776, 0
    %v861 = vsel %vm790, %v777, 0
    %v864 = vsel %vm790, %v778, 0
    %v867 = vsel %vm790, %v779, 0
    %v870 = vsel %vm790, %v780, 0
    %v873 = vsel %vm790, %v781, 0
    %v876 = vsel %vm790, %v782, 0
    %v879 = vsel %vm790, %v783, 0
    %v882 = vsel %vm790, %v784, 0
    %v885 = vsel %vm790, %v785, 0
    %887 = vmatprep.subr.mxu0 0.0
    %888 = vmatpush1.msra.mxu0 %v55
    %889 = vmatprep.subr.mxu0 0.0
    %890 = vmatpush1.msra.mxu0 %v56
    %891 = vmatprep.subr.mxu0 0.0
    %892 = vmatpush1.msra.mxu0 %v57
    %893 = vmatprep.subr.mxu0 0.0
    %894 = vmatpush1.msra.mxu0 %v58
    %895 = vmatprep.subr.mxu0 0.0
    %896 = vmatpush1.msra.mxu0 %v59
    %897 = vmatprep.subr.mxu0 0.0
    %898 = vmatpush1.msra.mxu0 %v60
    %899 = vmatprep.subr.mxu0 0.0
    %900 = vmatpush1.msra.mxu0 0.0
    %901 = vmatprep.subr.mxu0 0.0
    %902 = vmatpush1.msra.mxu0 0.0
    %903 = vmatprep.subr.mxu0 0.0
    %904 = vmatpush1.msra.mxu0 0.0
    %905 = vmatprep.subr.mxu0 0.0
    %906 = vmatpush1.msra.mxu0 0.0
    %907 = vmatprep.subr.mxu0 0.0
    %908 = vmatpush1.msra.mxu0 0.0
    %909 = vmatprep.subr.mxu0 0.0
    %910 = vmatpush1.msra.mxu0 0.0
    %911 = vmatprep.subr.mxu0 0.0
    %912 = vmatpush1.msra.mxu0 0.0
    %913 = vmatprep.subr.mxu0 0.0
    %914 = vmatpush1.msra.mxu0 0.0
    %915 = vmatprep.subr.mxu0 0.0
    %916 = vmatpush1.msra.mxu0 0.0
    %917 = vmatprep.subr.mxu0 0.0
    %918 = vmatpush1.msra.mxu0 0.0
    %919 = vmatprep.subr.mxu0 0.0
    %920 = vmatpush1.msra.mxu0 0.0
    %921 = vmatprep.subr.mxu0 0.0
    %922 = vmatpush1.msra.mxu0 0.0
    %923 = vmatprep.subr.mxu0 0.0
    %924 = vmatpush1.msra.mxu0 0.0
    %925 = vmatprep.subr.mxu0 0.0
    %926 = vmatpush1.msra.mxu0 0.0
    %927 = vmatprep.subr.mxu0 0.0
    %928 = vmatpush1.msra.mxu0 0.0
    %929 = vmatprep.subr.mxu0 0.0
    %930 = vmatpush1.msra.mxu0 0.0
    %931 = vmatprep.subr.mxu0 0.0
    %932 = vmatpush1.msra.mxu0 0.0
    %933 = vmatprep.subr.mxu0 0.0
    %934 = vmatpush1.msra.mxu0 0.0
    %935 = vmatprep.subr.mxu0 0.0
    %936 = vmatpush1.msra.mxu0 0.0
    %937 = vmatprep.subr.mxu0 0.0
    %938 = vmatpush1.msra.mxu0 0.0
    %939 = vmatprep.subr.mxu0 0.0
    %940 = vmatpush1.msra.mxu0 0.0
    %941 = vmatprep.subr.mxu0 0.0
    %942 = vmatpush1.msra.mxu0 0.0
    %943 = vmatprep.subr.mxu0 0.0
    %944 = vmatpush1.msra.mxu0 0.0
    %945 = vmatprep.subr.mxu0 0.0
    %946 = vmatpush1.msra.mxu0 0.0
    %947 = vmatprep.subr.mxu0 0.0
    %948 = vmatpush1.msra.mxu0 0.0
    %949 = vmatprep.subr.mxu0 0.0
    %950 = vmatpush1.msra.mxu0 0.0
    %951 = vmatprep.mubr.f32.mxu0 0.0
    %952 = vmatmul.mubr.f32.gmra.mrb[0].mxu0 %v792
    %v953 = vpop.f32.mrb[0].mxu0
    %v954 = vadd.f32 %v789, %v953
    %v955 = vpop.f32.mrb[0].mxu0
    %956 = vmatprep.mubr.f32.mxu0 0.0
    %957 = vmatmul.mubr.f32.gmra.mrb[0].mxu0 %v795
    %v958 = vpop.f32.mrb[0].mxu0
    %v959 = vadd.f32 %v789, %v958
    %v960 = vpop.f32.mrb[0].mxu0
    %961 = vmatprep.mubr.f32.mxu0 0.0
    %962 = vmatmul.mubr.f32.gmra.mrb[0].mxu0 %v798
    %v963 = vpop.f32.mrb[0].mxu0
    %v964 = vadd.f32 %v789, %v963
    %v965 = vpop.f32.mrb[0].mxu0
    %966 = vmatprep.mubr.f32.mxu0 0.0
    %967 = vmatmul.mubr.f32.gmra.mrb[0].mxu0 %v801
    %v968 = vpop.f32.mrb[0].mxu0
    %v969 = vadd.f32 %v789, %v968
    %v970 = vpop.f32.mrb[0].mxu0
    %971 = vmatprep.mubr.f32.mxu0 0.0
    %972 = vmatmul.mubr.f32.gmra.mrb[0].mxu0 %v804
    %v973 = vpop.f32.mrb[0].mxu0
    %v974 = vadd.f32 %v789, %v973
    %v975 = vpop.f32.mrb[0].mxu0
    %976 = vmatprep.mubr.f32.mxu0 0.0
    %977 = vmatmul.mubr.f32.gmra.mrb[0].mxu0 %v807
    %v978 = vpop.f32.mrb[0].mxu0
    %v979 = vadd.f32 %v789, %v978
    %v980 = vpop.f32.mrb[0].mxu0
    %981 = vmatprep.mubr.f32.mxu0 0.0
    %982 = vmatmul.mubr.f32.gmra.mrb[0].mxu0 %v810
    %v983 = vpop.f32.mrb[0].mxu0
    %v984 = vadd.f32 %v789, %v983
    %v985 = vpop.f32.mrb[0].mxu0
    %986 = vmatprep.mubr.f32.mxu0 0.0
    %987 = vmatmul.mubr.f32.gmra.mrb[0].mxu0 %v813
    %v988 = vpop.f32.mrb[0].mxu0
    %v989 = vadd.f32 %v789, %v988
    %v990 = vpop.f32.mrb[0].mxu0
    %991 = vmatprep.mubr.f32.mxu0 0.0
    %992 = vmatmul.mubr.f32.gmra.mrb[0].mxu0 %v816
    %v993 = vpop.f32.mrb[0].mxu0
    %v994 = vadd.f32 %v789, %v993
    %v995 = vpop.f32.mrb[0].mxu0
    %996 = vmatprep.mubr.f32.mxu0 0.0
    %997 = vmatmul.mubr.f32.gmra.mrb[0].mxu0 %v819
    %v998 = vpop.f32.mrb[0].mxu0
    %v999 = vadd.f32 %v789, %v998
    %v1000 = vpop.f32.mrb[0].mxu0
    %1001 = vmatprep.mubr.f32.mxu0 0.0
    %1002 = vmatmul.mubr.f32.gmra.mrb[0].mxu0 %v822
    %v1003 = vpop.f32.mrb[0].mxu0
    %v1004 = vadd.f32 %v789, %v1003
    %v1005 = vpop.f32.mrb[0].mxu0
    %1006 = vmatprep.mubr.f32.mxu0 0.0
    %1007 = vmatmul.mubr.f32.gmra.mrb[0].mxu0 %v825
    %v1008 = vpop.f32.mrb[0].mxu0
    %v1009 = vadd.f32 %v789, %v1008
    %v1010 = vpop.f32.mrb[0].mxu0
    %1011 = vmatprep.mubr.f32.mxu0 0.0
    %1012 = vmatmul.mubr.f32.gmra.mrb[0].mxu0 %v828
    %v1013 = vpop.f32.mrb[0].mxu0
    %v1014 = vadd.f32 %v789, %v1013
    %v1015 = vpop.f32.mrb[0].mxu0
    %1016 = vmatprep.mubr.f32.mxu0 0.0
    %1017 = vmatmul.mubr.f32.gmra.mrb[0].mxu0 %v831
    %v1018 = vpop.f32.mrb[0].mxu0
    %v1019 = vadd.f32 %v789, %v1018
    %v1020 = vpop.f32.mrb[0].mxu0
    %1021 = vmatprep.mubr.f32.mxu0 0.0
    %1022 = vmatmul.mubr.f32.gmra.mrb[0].mxu0 %v834
    %v1023 = vpop.f32.mrb[0].mxu0
    %v1024 = vadd.f32 %v789, %v1023
    %v1025 = vpop.f32.mrb[0].mxu0
    %1026 = vmatprep.mubr.f32.mxu0 0.0
    %1027 = vmatmul.mubr.f32.gmra.mrb[0].mxu0 %v837
    %v1028 = vpop.f32.mrb[0].mxu0
    %v1029 = vadd.f32 %v789, %v1028
    %v1030 = vpop.f32.mrb[0].mxu0
    %1031 = vmatprep.mubr.f32.mxu0 0.0
    %1032 = vmatmul.mubr.f32.gmra.mrb[0].mxu0 %v840
    %v1033 = vpop.f32.mrb[0].mxu0
    %v1034 = vadd.f32 %v789, %v1033
    %v1035 = vpop.f32.mrb[0].mxu0
    %1036 = vmatprep.mubr.f32.mxu0 0.0
    %1037 = vmatmul.mubr.f32.gmra.mrb[0].mxu0 %v843
    %v1038 = vpop.f32.mrb[0].mxu0
    %v1039 = vadd.f32 %v789, %v1038
    %v1040 = vpop.f32.mrb[0].mxu0
    %1041 = vmatprep.mubr.f32.mxu0 0.0
    %1042 = vmatmul.mubr.f32.gmra.mrb[0].mxu0 %v846
    %v1043 = vpop.f32.mrb[0].mxu0
    %v1044 = vadd.f32 %v789, %v1043
    %v1045 = vpop.f32.mrb[0].mxu0
    %1046 = vmatprep.mubr.f32.mxu0 0.0
    %1047 = vmatmul.mubr.f32.gmra.mrb[0].mxu0 %v849
    %v1048 = vpop.f32.mrb[0].mxu0
    %v1049 = vadd.f32 %v789, %v1048
    %v1050 = vpop.f32.mrb[0].mxu0
    %1051 = vmatprep.mubr.f32.mxu0 0.0
    %1052 = vmatmul.mubr.f32.gmra.mrb[0].mxu0 %v852
    %v1053 = vpop.f32.mrb[0].mxu0
    %v1054 = vadd.f32 %v789, %v1053
    %v1055 = vpop.f32.mrb[0].mxu0
    %1056 = vmatprep.mubr.f32.mxu0 0.0
    %1057 = vmatmul.mubr.f32.gmra.mrb[0].mxu0 %v855
    %v1058 = vpop.f32.mrb[0].mxu0
    %v1059 = vadd.f32 %v789, %v1058
    %v1060 = vpop.f32.mrb[0].mxu0
    %1061 = vmatprep.mubr.f32.mxu0 0.0
    %1062 = vmatmul.mubr.f32.gmra.mrb[0].mxu0 %v858
    %v1063 = vpop.f32.mrb[0].mxu0
    %v1064 = vadd.f32 %v789, %v1063
    %v1065 = vpop.f32.mrb[0].mxu0
    %1066 = vmatprep.mubr.f32.mxu0 0.0
    %1067 = vmatmul.mubr.f32.gmra.mrb[0].mxu0 %v861
    %v1068 = vpop.f32.mrb[0].mxu0
    %v1069 = vadd.f32 %v789, %v1068
    %v1070 = vpop.f32.mrb[0].mxu0
    %1071 = vmatprep.mubr.f32.mxu0 0.0
    %1072 = vmatmul.mubr.f32.gmra.mrb[0].mxu0 %v864
    %v1073 = vpop.f32.mrb[0].mxu0
    %v1074 = vadd.f32 %v789, %v1073
    %v1075 = vpop.f32.mrb[0].mxu0
    %1076 = vmatprep.mubr.f32.mxu0 0.0
    %1077 = vmatmul.mubr.f32.gmra.mrb[0].mxu0 %v867
    %v1078 = vpop.f32.mrb[0].mxu0
    %v1079 = vadd.f32 %v789, %v1078
    %v1080 = vpop.f32.mrb[0].mxu0
    %1081 = vmatprep.mubr.f32.mxu0 0.0
    %1082 = vmatmul.mubr.f32.gmra.mrb[0].mxu0 %v870
    %v1083 = vpop.f32.mrb[0].mxu0
    %v1084 = vadd.f32 %v789, %v1083
    %v1085 = vpop.f32.mrb[0].mxu0
    %1086 = vmatprep.mubr.f32.mxu0 0.0
    %1087 = vmatmul.mubr.f32.gmra.mrb[0].mxu0 %v873
    %v1088 = vpop.f32.mrb[0].mxu0
    %v1089 = vadd.f32 %v789, %v1088
    %v1090 = vpop.f32.mrb[0].mxu0
    %1091 = vmatprep.mubr.f32.mxu0 0.0
    %1092 = vmatmul.mubr.f32.gmra.mrb[0].mxu0 %v876
    %v1093 = vpop.f32.mrb[0].mxu0
    %v1094 = vadd.f32 %v789, %v1093
    %v1095 = vpop.f32.mrb[0].mxu0
    %1096 = vmatprep.mubr.f32.mxu0 0.0
    %1097 = vmatmul.mubr.f32.gmra.mrb[0].mxu0 %v879
    %v1098 = vpop.f32.mrb[0].mxu0
    %v1099 = vadd.f32 %v789, %v1098
    %v1100 = vpop.f32.mrb[0].mxu0
    %1101 = vmatprep.mubr.f32.mxu0 0.0
    %1102 = vmatmul.mubr.f32.gmra.mrb[0].mxu0 %v882
    %v1103 = vpop.f32.mrb[0].mxu0
    %v1104 = vadd.f32 %v789, %v1103
    %v1105 = vpop.f32.mrb[0].mxu0
    %1106 = vmatprep.mubr.f32.mxu0 0.0
    %1107 = vmatmul.mubr.f32.gmra.mrb[0].mxu0 %v885
    %v1108 = vpop.f32.mrb[0].mxu0
    %v1109 = vadd.f32 %v789, %v1108
    %v1110 = vpop.f32.mrb[0].mxu0
    %1111 = vdwg.mxu0
    %v1112 = vmax.f32 %v954, 0.0
    %v1113 = vmax.f32 %v959, 0.0
    %v1114 = vmax.f32 %v964, 0.0
    %v1115 = vmax.f32 %v969, 0.0
    %v1116 = vmax.f32 %v974, 0.0
    %v1117 = vmax.f32 %v979, 0.0
    %v1118 = vmax.f32 %v984, 0.0
    %v1119 = vmax.f32 %v989, 0.0
    %v1120 = vmax.f32 %v994, 0.0
    %v1121 = vmax.f32 %v999, 0.0
    %v1122 = vmax.f32 %v1004, 0.0
    %v1123 = vmax.f32 %v1009, 0.0
    %v1124 = vmax.f32 %v1014, 0.0
    %v1125 = vmax.f32 %v1019, 0.0
    %v1126 = vmax.f32 %v1024, 0.0
    %v1127 = vmax.f32 %v1029, 0.0
    %v1128 = vmax.f32 %v1034, 0.0
    %v1129 = vmax.f32 %v1039, 0.0
    %v1130 = vmax.f32 %v1044, 0.0
    %v1131 = vmax.f32 %v1049, 0.0
    %v1132 = vmax.f32 %v1054, 0.0
    %v1133 = vmax.f32 %v1059, 0.0
    %v1134 = vmax.f32 %v1064, 0.0
    %v1135 = vmax.f32 %v1069, 0.0
    %v1136 = vmax.f32 %v1074, 0.0
    %v1137 = vmax.f32 %v1079, 0.0
    %v1138 = vmax.f32 %v1084, 0.0
    %v1139 = vmax.f32 %v1089, 0.0
    %v1140 = vmax.f32 %v1094, 0.0
    %v1141 = vmax.f32 %v1099, 0.0
    %v1142 = vmax.f32 %v1104, 0.0
    %v1143 = vmax.f32 %v1109, 0.0
    %v1144 = vlaneseq
    %v1145 = vshrl.u32 %v1144, 7
    %v1146 = vsub.s32 0, %v1145
    %v1147 = vrot.slane %v61, %v1146
    %v1148 = vmul.f32 %v1112, %v1147
    %v1149 = vmul.f32 %v1113, %v1147
    %v1150 = vmul.f32 %v1114, %v1147
    %v1151 = vmul.f32 %v1115, %v1147
    %v1152 = vmul.f32 %v1116, %v1147
    %v1153 = vmul.f32 %v1117, %v1147
    %v1154 = vmul.f32 %v1118, %v1147
    %v1155 = vmul.f32 %v1119, %v1147
    %v1156 = vmul.f32 %v1120, %v1147
    %v1157 = vmul.f32 %v1121, %v1147
    %v1158 = vmul.f32 %v1122, %v1147
    %v1159 = vmul.f32 %v1123, %v1147
    %v1160 = vmul.f32 %v1124, %v1147
    %v1161 = vmul.f32 %v1125, %v1147
    %v1162 = vmul.f32 %v1126, %v1147
    %v1163 = vmul.f32 %v1127, %v1147
    %v1164 = vmul.f32 %v1128, %v1147
    %v1165 = vmul.f32 %v1129, %v1147
    %v1166 = vmul.f32 %v1130, %v1147
    %v1167 = vmul.f32 %v1131, %v1147
    %v1168 = vmul.f32 %v1132, %v1147
    %v1169 = vmul.f32 %v1133, %v1147
    %v1170 = vmul.f32 %v1134, %v1147
    %v1171 = vmul.f32 %v1135, %v1147
    %v1172 = vmul.f32 %v1136, %v1147
    %v1173 = vmul.f32 %v1137, %v1147
    %v1174 = vmul.f32 %v1138, %v1147
    %v1175 = vmul.f32 %v1139, %v1147
    %v1176 = vmul.f32 %v1140, %v1147
    %v1177 = vmul.f32 %v1141, %v1147
    %v1178 = vmul.f32 %v1142, %v1147
    %v1179 = vmul.f32 %v1143, %v1147
    %vm1180 = vcmask 523264
    %v1181 = vsel %vm1180, %v1148, 0.0
    %1182 = vadd.xlane.f32.xlu0 %v1181
    %v1183 = vpop.xlane.xlu0 %1182
    %v1184 = vsel %vm1180, %v1149, 0.0
    %1185 = vadd.xlane.f32.xlu0 %v1184
    %v1186 = vpop.xlane.xlu0 %1185
    %v1187 = vsel %vm1180, %v1150, 0.0
    %1188 = vadd.xlane.f32.xlu0 %v1187
    %v1189 = vpop.xlane.xlu0 %1188
    %v1190 = vsel %vm1180, %v1151, 0.0
    %1191 = vadd.xlane.f32.xlu0 %v1190
    %v1192 = vpop.xlane.xlu0 %1191
    %v1193 = vsel %vm1180, %v1152, 0.0
    %1194 = vadd.xlane.f32.xlu0 %v1193
    %v1195 = vpop.xlane.xlu0 %1194
    %v1196 = vsel %vm1180, %v1153, 0.0
    %1197 = vadd.xlane.f32.xlu0 %v1196
    %v1198 = vpop.xlane.xlu0 %1197
    %v1199 = vsel %vm1180, %v1154, 0.0
    %1200 = vadd.xlane.f32.xlu0 %v1199
    %v1201 = vpop.xlane.xlu0 %1200
    %v1202 = vsel %vm1180, %v1155, 0.0
    %1203 = vadd.xlane.f32.xlu0 %v1202
    %v1204 = vpop.xlane.xlu0 %1203
    %v1205 = vsel %vm1180, %v1156, 0.0
    %1206 = vadd.xlane.f32.xlu0 %v1205
    %v1207 = vpop.xlane.xlu0 %1206
    %v1208 = vsel %vm1180, %v1157, 0.0
    %1209 = vadd.xlane.f32.xlu0 %v1208
    %v1210 = vpop.xlane.xlu0 %1209
    %v1211 = vsel %vm1180, %v1158, 0.0
    %1212 = vadd.xlane.f32.xlu0 %v1211
    %v1213 = vpop.xlane.xlu0 %1212
    %v1214 = vsel %vm1180, %v1159, 0.0
    %1215 = vadd.xlane.f32.xlu0 %v1214
    %v1216 = vpop.xlane.xlu0 %1215
    %v1217 = vsel %vm1180, %v1160, 0.0
    %1218 = vadd.xlane.f32.xlu0 %v1217
    %v1219 = vpop.xlane.xlu0 %1218
    %v1220 = vsel %vm1180, %v1161, 0.0
    %1221 = vadd.xlane.f32.xlu0 %v1220
    %v1222 = vpop.xlane.xlu0 %1221
    %v1223 = vsel %vm1180, %v1162, 0.0
    %1224 = vadd.xlane.f32.xlu0 %v1223
    %v1225 = vpop.xlane.xlu0 %1224
    %v1226 = vsel %vm1180, %v1163, 0.0
    %1227 = vadd.xlane.f32.xlu0 %v1226
    %v1228 = vpop.xlane.xlu0 %1227
    %v1229 = vsel %vm1180, %v1164, 0.0
    %1230 = vadd.xlane.f32.xlu0 %v1229
    %v1231 = vpop.xlane.xlu0 %1230
    %v1232 = vsel %vm1180, %v1165, 0.0
    %1233 = vadd.xlane.f32.xlu0 %v1232
    %v1234 = vpop.xlane.xlu0 %1233
    %v1235 = vsel %vm1180, %v1166, 0.0
    %1236 = vadd.xlane.f32.xlu0 %v1235
    %v1237 = vpop.xlane.xlu0 %1236
    %v1238 = vsel %vm1180, %v1167, 0.0
    %1239 = vadd.xlane.f32.xlu0 %v1238
    %v1240 = vpop.xlane.xlu0 %1239
    %v1241 = vsel %vm1180, %v1168, 0.0
    %1242 = vadd.xlane.f32.xlu0 %v1241
    %v1243 = vpop.xlane.xlu0 %1242
    %v1244 = vsel %vm1180, %v1169, 0.0
    %1245 = vadd.xlane.f32.xlu0 %v1244
    %v1246 = vpop.xlane.xlu0 %1245
    %v1247 = vsel %vm1180, %v1170, 0.0
    %1248 = vadd.xlane.f32.xlu0 %v1247
    %v1249 = vpop.xlane.xlu0 %1248
    %v1250 = vsel %vm1180, %v1171, 0.0
    %1251 = vadd.xlane.f32.xlu0 %v1250
    %v1252 = vpop.xlane.xlu0 %1251
    %v1253 = vsel %vm1180, %v1172, 0.0
    %1254 = vadd.xlane.f32.xlu0 %v1253
    %v1255 = vpop.xlane.xlu0 %1254
    %v1256 = vsel %vm1180, %v1173, 0.0
    %1257 = vadd.xlane.f32.xlu0 %v1256
    %v1258 = vpop.xlane.xlu0 %1257
    %v1259 = vsel %vm1180, %v1174, 0.0
    %1260 = vadd.xlane.f32.xlu0 %v1259
    %v1261 = vpop.xlane.xlu0 %1260
    %v1262 = vsel %vm1180, %v1175, 0.0
    %1263 = vadd.xlane.f32.xlu0 %v1262
    %v1264 = vpop.xlane.xlu0 %1263
    %v1265 = vsel %vm1180, %v1176, 0.0
    %1266 = vadd.xlane.f32.xlu0 %v1265
    %v1267 = vpop.xlane.xlu0 %1266
    %v1268 = vsel %vm1180, %v1177, 0.0
    %1269 = vadd.xlane.f32.xlu0 %v1268
    %v1270 = vpop.xlane.xlu0 %1269
    %v1271 = vsel %vm1180, %v1178, 0.0
    %1272 = vadd.xlane.f32.xlu0 %v1271
    %v1273 = vpop.xlane.xlu0 %1272
    %v1274 = vsel %vm1180, %v1179, 0.0
    %1275 = vadd.xlane.f32.xlu0 %v1274
    %v1276 = vpop.xlane.xlu0 %1275
    %s1278 = vtos %v65
    %v1279 = vstv %s1278
    %v1281 = vadd.f32 %v1183, %v1279
    %v1282 = vadd.f32 %v1186, %v1279
    %v1283 = vadd.f32 %v1189, %v1279
    %v1284 = vadd.f32 %v1192, %v1279
    %v1285 = vadd.f32 %v1195, %v1279
    %v1286 = vadd.f32 %v1198, %v1279
    %v1287 = vadd.f32 %v1201, %v1279
    %v1288 = vadd.f32 %v1204, %v1279
    %v1289 = vadd.f32 %v1207, %v1279
    %v1290 = vadd.f32 %v1210, %v1279
    %v1291 = vadd.f32 %v1213, %v1279
    %v1292 = vadd.f32 %v1216, %v1279
    %v1293 = vadd.f32 %v1219, %v1279
    %v1294 = vadd.f32 %v1222, %v1279
    %v1295 = vadd.f32 %v1225, %v1279
    %v1296 = vadd.f32 %v1228, %v1279
    %v1297 = vadd.f32 %v1231, %v1279
    %v1298 = vadd.f32 %v1234, %v1279
    %v1299 = vadd.f32 %v1237, %v1279
    %v1300 = vadd.f32 %v1240, %v1279
    %v1301 = vadd.f32 %v1243, %v1279
    %v1302 = vadd.f32 %v1246, %v1279
    %v1303 = vadd.f32 %v1249, %v1279
    %v1304 = vadd.f32 %v1252, %v1279
    %v1305 = vadd.f32 %v1255, %v1279
    %v1306 = vadd.f32 %v1258, %v1279
    %v1307 = vadd.f32 %v1261, %v1279
    %v1308 = vadd.f32 %v1264, %v1279
    %v1309 = vadd.f32 %v1267, %v1279
    %v1310 = vadd.f32 %v1270, %v1279
    %v1311 = vadd.f32 %v1273, %v1279
    %v1312 = vadd.f32 %v1276, %v1279
    %v1345 = vlaneseq
    %v1346 = vand.u32 %v1345, 127
    %v1347 = vlaneseq
    %v1348 = vshrl.u32 %v1347, 7
    %v1349 = vsub.s32 %v1346, %v1348
    %v1350 = vrot.slane %v1281, %v1349
    %v1351 = vadd.s32 %v1346, 4294967288
    %v1352 = vlaneseq
    %v1353 = vshrl.u32 %v1352, 7
    %v1354 = vsub.s32 %v1351, %v1353
    %v1355 = vrot.slane %v1282, %v1354
    %vm1356 = vcmask 130112
    %v1357 = vsel %vm1356, %v1355, %v1350
    %v1358 = vadd.s32 %v1346, 4294967280
    %v1359 = vlaneseq
    %v1360 = vshrl.u32 %v1359, 7
    %v1361 = vsub.s32 %v1358, %v1360
    %v1362 = vrot.slane %v1283, %v1361
    %vm1363 = vcmask 195712
    %v1364 = vsel %vm1363, %v1362, %v1357
    %v1365 = vadd.s32 %v1346, 4294967272
    %v1366 = vlaneseq
    %v1367 = vshrl.u32 %v1366, 7
    %v1368 = vsub.s32 %v1365, %v1367
    %v1369 = vrot.slane %v1284, %v1368
    %vm1370 = vcmask 261312
    %v1371 = vsel %vm1370, %v1369, %v1364
    %v1372 = vlaneseq
    %v1373 = vshrl.u32 %v1372, 7
    %v1374 = vsub.s32 %v1346, %v1373
    %v1375 = vrot.slane %v1285, %v1374
    %v1376 = vlaneseq
    %v1377 = vshrl.u32 %v1376, 7
    %v1378 = vsub.s32 %v1351, %v1377
    %v1379 = vrot.slane %v1286, %v1378
    %v1380 = vsel %vm1356, %v1379, %v1375
    %v1381 = vlaneseq
    %v1382 = vshrl.u32 %v1381, 7
    %v1383 = vsub.s32 %v1358, %v1382
    %v1384 = vrot.slane %v1287, %v1383
    %v1385 = vsel %vm1363, %v1384, %v1380
    %v1386 = vlaneseq
    %v1387 = vshrl.u32 %v1386, 7
    %v1388 = vsub.s32 %v1365, %v1387
    %v1389 = vrot.slane %v1288, %v1388
    %v1390 = vsel %vm1370, %v1389, %v1385
    %v1391 = vlaneseq
    %v1392 = vshrl.u32 %v1391, 7
    %v1393 = vsub.s32 %v1346, %v1392
    %v1394 = vrot.slane %v1289, %v1393
    %v1395 = vlaneseq
    %v1396 = vshrl.u32 %v1395, 7
    %v1397 = vsub.s32 %v1351, %v1396
    %v1398 = vrot.slane %v1290, %v1397
    %v1399 = vsel %vm1356, %v1398, %v1394
    %v1400 = vlaneseq
    %v1401 = vshrl.u32 %v1400, 7
    %v1402 = vsub.s32 %v1358, %v1401
    %v1403 = vrot.slane %v1291, %v1402
    %v1404 = vsel %vm1363, %v1403, %v1399
    %v1405 = vlaneseq
    %v1406 = vshrl.u32 %v1405, 7
    %v1407 = vsub.s32 %v1365, %v1406
    %v1408 = vrot.slane %v1292, %v1407
    %v1409 = vsel %vm1370, %v1408, %v1404
    %v1410 = vlaneseq
    %v1411 = vshrl.u32 %v1410, 7
    %v1412 = vsub.s32 %v1346, %v1411
    %v1413 = vrot.slane %v1293, %v1412
    %v1414 = vlaneseq
    %v1415 = vshrl.u32 %v1414, 7
    %v1416 = vsub.s32 %v1351, %v1415
    %v1417 = vrot.slane %v1294, %v1416
    %v1418 = vsel %vm1356, %v1417, %v1413
    %v1419 = vlaneseq
    %v1420 = vshrl.u32 %v1419, 7
    %v1421 = vsub.s32 %v1358, %v1420
    %v1422 = vrot.slane %v1295, %v1421
    %v1423 = vsel %vm1363, %v1422, %v1418
    %v1424 = vlaneseq
    %v1425 = vshrl.u32 %v1424, 7
    %v1426 = vsub.s32 %v1365, %v1425
    %v1427 = vrot.slane %v1296, %v1426
    %v1428 = vsel %vm1370, %v1427, %v1423
    %v1429 = vlaneseq
    %v1430 = vshrl.u32 %v1429, 7
    %v1431 = vsub.s32 %v1346, %v1430
    %v1432 = vrot.slane %v1297, %v1431
    %v1433 = vlaneseq
    %v1434 = vshrl.u32 %v1433, 7
    %v1435 = vsub.s32 %v1351, %v1434
    %v1436 = vrot.slane %v1298, %v1435
    %v1437 = vsel %vm1356, %v1436, %v1432
    %v1438 = vlaneseq
    %v1439 = vshrl.u32 %v1438, 7
    %v1440 = vsub.s32 %v1358, %v1439
    %v1441 = vrot.slane %v1299, %v1440
    %v1442 = vsel %vm1363, %v1441, %v1437
    %v1443 = vlaneseq
    %v1444 = vshrl.u32 %v1443, 7
    %v1445 = vsub.s32 %v1365, %v1444
    %v1446 = vrot.slane %v1300, %v1445
    %v1447 = vsel %vm1370, %v1446, %v1442
    %v1448 = vlaneseq
    %v1449 = vshrl.u32 %v1448, 7
    %v1450 = vsub.s32 %v1346, %v1449
    %v1451 = vrot.slane %v1301, %v1450
    %v1452 = vlaneseq
    %v1453 = vshrl.u32 %v1452, 7
    %v1454 = vsub.s32 %v1351, %v1453
    %v1455 = vrot.slane %v1302, %v1454
    %v1456 = vsel %vm1356, %v1455, %v1451
    %v1457 = vlaneseq
    %v1458 = vshrl.u32 %v1457, 7
    %v1459 = vsub.s32 %v1358, %v1458
    %v1460 = vrot.slane %v1303, %v1459
    %v1461 = vsel %vm1363, %v1460, %v1456
    %v1462 = vlaneseq
    %v1463 = vshrl.u32 %v1462, 7
    %v1464 = vsub.s32 %v1365, %v1463
    %v1465 = vrot.slane %v1304, %v1464
    %v1466 = vsel %vm1370, %v1465, %v1461
    %v1467 = vlaneseq
    %v1468 = vshrl.u32 %v1467, 7
    %v1469 = vsub.s32 %v1346, %v1468
    %v1470 = vrot.slane %v1305, %v1469
    %v1471 = vlaneseq
    %v1472 = vshrl.u32 %v1471, 7
    %v1473 = vsub.s32 %v1351, %v1472
    %v1474 = vrot.slane %v1306, %v1473
    %v1475 = vsel %vm1356, %v1474, %v1470
    %v1476 = vlaneseq
    %v1477 = vshrl.u32 %v1476, 7
    %v1478 = vsub.s32 %v1358, %v1477
    %v1479 = vrot.slane %v1307, %v1478
    %v1480 = vsel %vm1363, %v1479, %v1475
    %v1481 = vlaneseq
    %v1482 = vshrl.u32 %v1481, 7
    %v1483 = vsub.s32 %v1365, %v1482
    %v1484 = vrot.slane %v1308, %v1483
    %v1485 = vsel %vm1370, %v1484, %v1480
    %v1486 = vlaneseq
    %v1487 = vshrl.u32 %v1486, 7
    %v1488 = vsub.s32 %v1346, %v1487
    %v1489 = vrot.slane %v1309, %v1488
    %v1490 = vlaneseq
    %v1491 = vshrl.u32 %v1490, 7
    %v1492 = vsub.s32 %v1351, %v1491
    %v1493 = vrot.slane %v1310, %v1492
    %v1494 = vsel %vm1356, %v1493, %v1489
    %v1495 = vlaneseq
    %v1496 = vshrl.u32 %v1495, 7
    %v1497 = vsub.s32 %v1358, %v1496
    %v1498 = vrot.slane %v1311, %v1497
    %v1499 = vsel %vm1363, %v1498, %v1494
    %v1500 = vlaneseq
    %v1501 = vshrl.u32 %v1500, 7
    %v1502 = vsub.s32 %v1365, %v1501
    %v1503 = vrot.slane %v1312, %v1502
    %v1504 = vsel %vm1370, %v1503, %v1499
    %vm1505 = vcmask 1041409
    %v1506 = vsel %vm1505, %v1390, %v1371
    %vm1507 = vcmask 1042434
    %v1508 = vsel %vm1507, %v1409, %v1506
    %vm1509 = vcmask 1043459
    %v1510 = vsel %vm1509, %v1428, %v1508
    %vm1511 = vcmask 1044484
    %v1512 = vsel %vm1511, %v1447, %v1510
    %vm1513 = vcmask 1045509
    %v1514 = vsel %vm1513, %v1466, %v1512
    %vm1515 = vcmask 1046534
    %v1516 = vsel %vm1515, %v1485, %v1514
    %vm1517 = vcmask 1047559
    %v1518 = vsel %vm1517, %v1504, %v1516
    %v1520 = vsel %vm432, %v1518, -inf
    %1521 = vmax.xlane.f32.xlu0 %v1520
    %v1522 = vpop.xlane.xlu0 %1521
    %v1524 = vlaneseq
    %v1525 = vshrl.u32 %v1524, 7
    %v1526 = vsub.s32 0, %v1525
    %v1527 = vrot.slane %v1522, %v1526
    %v1528 = vlaneseq
    %v1529 = vshrl.u32 %v1528, 7
    %v1530 = vsub.s32 1, %v1529
    %v1531 = vrot.slane %v1522, %v1530
    %v1532 = vlaneseq
    %v1533 = vshrl.u32 %v1532, 7
    %v1534 = vsub.s32 2, %v1533
    %v1535 = vrot.slane %v1522, %v1534
    %v1536 = vlaneseq
    %v1537 = vshrl.u32 %v1536, 7
    %v1538 = vsub.s32 3, %v1537
    %v1539 = vrot.slane %v1522, %v1538
    %v1540 = vlaneseq
    %v1541 = vshrl.u32 %v1540, 7
    %v1542 = vsub.s32 4, %v1541
    %v1543 = vrot.slane %v1522, %v1542
    %v1544 = vlaneseq
    %v1545 = vshrl.u32 %v1544, 7
    %v1546 = vsub.s32 5, %v1545
    %v1547 = vrot.slane %v1522, %v1546
    %v1548 = vlaneseq
    %v1549 = vshrl.u32 %v1548, 7
    %v1550 = vsub.s32 6, %v1549
    %v1551 = vrot.slane %v1522, %v1550
    %v1552 = vlaneseq
    %v1553 = vshrl.u32 %v1552, 7
    %v1554 = vsub.s32 7, %v1553
    %v1555 = vrot.slane %v1522, %v1554
    %v1564 = vsub.f32 %v1281, %v1527
    %v1565 = vsub.f32 %v1282, %v1527
    %v1566 = vsub.f32 %v1283, %v1527
    %v1567 = vsub.f32 %v1284, %v1527
    %v1568 = vsub.f32 %v1285, %v1531
    %v1569 = vsub.f32 %v1286, %v1531
    %v1570 = vsub.f32 %v1287, %v1531
    %v1571 = vsub.f32 %v1288, %v1531
    %v1572 = vsub.f32 %v1289, %v1535
    %v1573 = vsub.f32 %v1290, %v1535
    %v1574 = vsub.f32 %v1291, %v1535
    %v1575 = vsub.f32 %v1292, %v1535
    %v1576 = vsub.f32 %v1293, %v1539
    %v1577 = vsub.f32 %v1294, %v1539
    %v1578 = vsub.f32 %v1295, %v1539
    %v1579 = vsub.f32 %v1296, %v1539
    %v1580 = vsub.f32 %v1297, %v1543
    %v1581 = vsub.f32 %v1298, %v1543
    %v1582 = vsub.f32 %v1299, %v1543
    %v1583 = vsub.f32 %v1300, %v1543
    %v1584 = vsub.f32 %v1301, %v1547
    %v1585 = vsub.f32 %v1302, %v1547
    %v1586 = vsub.f32 %v1303, %v1547
    %v1587 = vsub.f32 %v1304, %v1547
    %v1588 = vsub.f32 %v1305, %v1551
    %v1589 = vsub.f32 %v1306, %v1551
    %v1590 = vsub.f32 %v1307, %v1551
    %v1591 = vsub.f32 %v1308, %v1551
    %v1592 = vsub.f32 %v1309, %v1555
    %v1593 = vsub.f32 %v1310, %v1555
    %v1594 = vsub.f32 %v1311, %v1555
    %v1595 = vsub.f32 %v1312, %v1555
    %v1596 = vmul.f32 %v1564, 1.442695
    %v1597 = vpow.pop %v1596
    %v1598 = vmul.f32 %v1565, 1.442695
    %v1599 = vpow.pop %v1598
    %v1600 = vmul.f32 %v1566, 1.442695
    %v1601 = vpow.pop %v1600
    %v1602 = vmul.f32 %v1567, 1.442695
    %v1603 = vpow.pop %v1602
    %v1604 = vmul.f32 %v1568, 1.442695
    %v1605 = vpow.pop %v1604
    %v1606 = vmul.f32 %v1569, 1.442695
    %v1607 = vpow.pop %v1606
    %v1608 = vmul.f32 %v1570, 1.442695
    %v1609 = vpow.pop %v1608
    %v1610 = vmul.f32 %v1571, 1.442695
    %v1611 = vpow.pop %v1610
    %v1612 = vmul.f32 %v1572, 1.442695
    %v1613 = vpow.pop %v1612
    %v1614 = vmul.f32 %v1573, 1.442695
    %v1615 = vpow.pop %v1614
    %v1616 = vmul.f32 %v1574, 1.442695
    %v1617 = vpow.pop %v1616
    %v1618 = vmul.f32 %v1575, 1.442695
    %v1619 = vpow.pop %v1618
    %v1620 = vmul.f32 %v1576, 1.442695
    %v1621 = vpow.pop %v1620
    %v1622 = vmul.f32 %v1577, 1.442695
    %v1623 = vpow.pop %v1622
    %v1624 = vmul.f32 %v1578, 1.442695
    %v1625 = vpow.pop %v1624
    %v1626 = vmul.f32 %v1579, 1.442695
    %v1627 = vpow.pop %v1626
    %v1628 = vmul.f32 %v1580, 1.442695
    %v1629 = vpow.pop %v1628
    %v1630 = vmul.f32 %v1581, 1.442695
    %v1631 = vpow.pop %v1630
    %v1632 = vmul.f32 %v1582, 1.442695
    %v1633 = vpow.pop %v1632
    %v1634 = vmul.f32 %v1583, 1.442695
    %v1635 = vpow.pop %v1634
    %v1636 = vmul.f32 %v1584, 1.442695
    %v1637 = vpow.pop %v1636
    %v1638 = vmul.f32 %v1585, 1.442695
    %v1639 = vpow.pop %v1638
    %v1640 = vmul.f32 %v1586, 1.442695
    %v1641 = vpow.pop %v1640
    %v1642 = vmul.f32 %v1587, 1.442695
    %v1643 = vpow.pop %v1642
    %v1644 = vmul.f32 %v1588, 1.442695
    %v1645 = vpow.pop %v1644
    %v1646 = vmul.f32 %v1589, 1.442695
    %v1647 = vpow.pop %v1646
    %v1648 = vmul.f32 %v1590, 1.442695
    %v1649 = vpow.pop %v1648
    %v1650 = vmul.f32 %v1591, 1.442695
    %v1651 = vpow.pop %v1650
    %v1652 = vmul.f32 %v1592, 1.442695
    %v1653 = vpow.pop %v1652
    %v1654 = vmul.f32 %v1593, 1.442695
    %v1655 = vpow.pop %v1654
    %v1656 = vmul.f32 %v1594, 1.442695
    %v1657 = vpow.pop %v1656
    %v1658 = vmul.f32 %v1595, 1.442695
    %v1659 = vpow.pop %v1658
    %1692 = vset.pattern.permute.xlu0 0
    %1693 = vperm.xlu0 %1692, %v1597
    %v1694 = vpop.permute.xlu0 %1693
    %1695 = vset.pattern.permute.xlu0 0
    %1696 = vperm.xlu0 %1695, %v1599
    %v1697 = vpop.permute.xlu0 %1696
    %1698 = vset.pattern.permute.xlu0 0
    %1699 = vperm.xlu0 %1698, %v1601
    %v1700 = vpop.permute.xlu0 %1699
    %1701 = vset.pattern.permute.xlu0 0
    %1702 = vperm.xlu0 %1701, %v1603
    %v1703 = vpop.permute.xlu0 %1702
    %1704 = vset.pattern.permute.xlu0 0
    %1705 = vperm.xlu0 %1704, %v1605
    %v1706 = vpop.permute.xlu0 %1705
    %1707 = vset.pattern.permute.xlu0 0
    %1708 = vperm.xlu0 %1707, %v1607
    %v1709 = vpop.permute.xlu0 %1708
    %1710 = vset.pattern.permute.xlu0 0
    %1711 = vperm.xlu0 %1710, %v1609
    %v1712 = vpop.permute.xlu0 %1711
    %1713 = vset.pattern.permute.xlu0 0
    %1714 = vperm.xlu0 %1713, %v1611
    %v1715 = vpop.permute.xlu0 %1714
    %1716 = vset.pattern.permute.xlu0 0
    %1717 = vperm.xlu0 %1716, %v1613
    %v1718 = vpop.permute.xlu0 %1717
    %1719 = vset.pattern.permute.xlu0 0
    %1720 = vperm.xlu0 %1719, %v1615
    %v1721 = vpop.permute.xlu0 %1720
    %1722 = vset.pattern.permute.xlu0 0
    %1723 = vperm.xlu0 %1722, %v1617
    %v1724 = vpop.permute.xlu0 %1723
    %1725 = vset.pattern.permute.xlu0 0
    %1726 = vperm.xlu0 %1725, %v1619
    %v1727 = vpop.permute.xlu0 %1726
    %1728 = vset.pattern.permute.xlu0 0
    %1729 = vperm.xlu0 %1728, %v1621
    %v1730 = vpop.permute.xlu0 %1729
    %1731 = vset.pattern.permute.xlu0 0
    %1732 = vperm.xlu0 %1731, %v1623
    %v1733 = vpop.permute.xlu0 %1732
    %1734 = vset.pattern.permute.xlu0 0
    %1735 = vperm.xlu0 %1734, %v1625
    %v1736 = vpop.permute.xlu0 %1735
    %1737 = vset.pattern.permute.xlu0 0
    %1738 = vperm.xlu0 %1737, %v1627
    %v1739 = vpop.permute.xlu0 %1738
    %1740 = vset.pattern.permute.xlu0 0
    %1741 = vperm.xlu0 %1740, %v1629
    %v1742 = vpop.permute.xlu0 %1741
    %1743 = vset.pattern.permute.xlu0 0
    %1744 = vperm.xlu0 %1743, %v1631
    %v1745 = vpop.permute.xlu0 %1744
    %1746 = vset.pattern.permute.xlu0 0
    %1747 = vperm.xlu0 %1746, %v1633
    %v1748 = vpop.permute.xlu0 %1747
    %1749 = vset.pattern.permute.xlu0 0
    %1750 = vperm.xlu0 %1749, %v1635
    %v1751 = vpop.permute.xlu0 %1750
    %1752 = vset.pattern.permute.xlu0 0
    %1753 = vperm.xlu0 %1752, %v1637
    %v1754 = vpop.permute.xlu0 %1753
    %1755 = vset.pattern.permute.xlu0 0
    %1756 = vperm.xlu0 %1755, %v1639
    %v1757 = vpop.permute.xlu0 %1756
    %1758 = vset.pattern.permute.xlu0 0
    %1759 = vperm.xlu0 %1758, %v1641
    %v1760 = vpop.permute.xlu0 %1759
    %1761 = vset.pattern.permute.xlu0 0
    %1762 = vperm.xlu0 %1761, %v1643
    %v1763 = vpop.permute.xlu0 %1762
    %1764 = vset.pattern.permute.xlu0 0
    %1765 = vperm.xlu0 %1764, %v1645
    %v1766 = vpop.permute.xlu0 %1765
    %1767 = vset.pattern.permute.xlu0 0
    %1768 = vperm.xlu0 %1767, %v1647
    %v1769 = vpop.permute.xlu0 %1768
    %1770 = vset.pattern.permute.xlu0 0
    %1771 = vperm.xlu0 %1770, %v1649
    %v1772 = vpop.permute.xlu0 %1771
    %1773 = vset.pattern.permute.xlu0 0
    %1774 = vperm.xlu0 %1773, %v1651
    %v1775 = vpop.permute.xlu0 %1774
    %1776 = vset.pattern.permute.xlu0 0
    %1777 = vperm.xlu0 %1776, %v1653
    %v1778 = vpop.permute.xlu0 %1777
    %1779 = vset.pattern.permute.xlu0 0
    %1780 = vperm.xlu0 %1779, %v1655
    %v1781 = vpop.permute.xlu0 %1780
    %1782 = vset.pattern.permute.xlu0 0
    %1783 = vperm.xlu0 %1782, %v1657
    %v1784 = vpop.permute.xlu0 %1783
    %1785 = vset.pattern.permute.xlu0 0
    %1786 = vperm.xlu0 %1785, %v1659
    %v1787 = vpop.permute.xlu0 %1786
    %v1788 = vlaneseq
    %v1789 = vshrl.u32 %v1788, 7
    %v1790 = vsub.s32 %v1346, %v1789
    %v1791 = vrot.slane %v1694, %v1790
    %v1792 = vlaneseq
    %v1793 = vshrl.u32 %v1792, 7
    %v1794 = vsub.s32 %v1351, %v1793
    %v1795 = vrot.slane %v1697, %v1794
    %v1796 = vsel %vm1356, %v1795, %v1791
    %v1797 = vlaneseq
    %v1798 = vshrl.u32 %v1797, 7
    %v1799 = vsub.s32 %v1358, %v1798
    %v1800 = vrot.slane %v1700, %v1799
    %v1801 = vsel %vm1363, %v1800, %v1796
    %v1802 = vlaneseq
    %v1803 = vshrl.u32 %v1802, 7
    %v1804 = vsub.s32 %v1365, %v1803
    %v1805 = vrot.slane %v1703, %v1804
    %v1806 = vsel %vm1370, %v1805, %v1801
    %v1807 = vlaneseq
    %v1808 = vshrl.u32 %v1807, 7
    %v1809 = vsub.s32 %v1346, %v1808
    %v1810 = vrot.slane %v1706, %v1809
    %v1811 = vlaneseq
    %v1812 = vshrl.u32 %v1811, 7
    %v1813 = vsub.s32 %v1351, %v1812
    %v1814 = vrot.slane %v1709, %v1813
    %v1815 = vsel %vm1356, %v1814, %v1810
    %v1816 = vlaneseq
    %v1817 = vshrl.u32 %v1816, 7
    %v1818 = vsub.s32 %v1358, %v1817
    %v1819 = vrot.slane %v1712, %v1818
    %v1820 = vsel %vm1363, %v1819, %v1815
    %v1821 = vlaneseq
    %v1822 = vshrl.u32 %v1821, 7
    %v1823 = vsub.s32 %v1365, %v1822
    %v1824 = vrot.slane %v1715, %v1823
    %v1825 = vsel %vm1370, %v1824, %v1820
    %v1826 = vlaneseq
    %v1827 = vshrl.u32 %v1826, 7
    %v1828 = vsub.s32 %v1346, %v1827
    %v1829 = vrot.slane %v1718, %v1828
    %v1830 = vlaneseq
    %v1831 = vshrl.u32 %v1830, 7
    %v1832 = vsub.s32 %v1351, %v1831
    %v1833 = vrot.slane %v1721, %v1832
    %v1834 = vsel %vm1356, %v1833, %v1829
    %v1835 = vlaneseq
    %v1836 = vshrl.u32 %v1835, 7
    %v1837 = vsub.s32 %v1358, %v1836
    %v1838 = vrot.slane %v1724, %v1837
    %v1839 = vsel %vm1363, %v1838, %v1834
    %v1840 = vlaneseq
    %v1841 = vshrl.u32 %v1840, 7
    %v1842 = vsub.s32 %v1365, %v1841
    %v1843 = vrot.slane %v1727, %v1842
    %v1844 = vsel %vm1370, %v1843, %v1839
    %v1845 = vlaneseq
    %v1846 = vshrl.u32 %v1845, 7
    %v1847 = vsub.s32 %v1346, %v1846
    %v1848 = vrot.slane %v1730, %v1847
    %v1849 = vlaneseq
    %v1850 = vshrl.u32 %v1849, 7
    %v1851 = vsub.s32 %v1351, %v1850
    %v1852 = vrot.slane %v1733, %v1851
    %v1853 = vsel %vm1356, %v1852, %v1848
    %v1854 = vlaneseq
    %v1855 = vshrl.u32 %v1854, 7
    %v1856 = vsub.s32 %v1358, %v1855
    %v1857 = vrot.slane %v1736, %v1856
    %v1858 = vsel %vm1363, %v1857, %v1853
    %v1859 = vlaneseq
    %v1860 = vshrl.u32 %v1859, 7
    %v1861 = vsub.s32 %v1365, %v1860
    %v1862 = vrot.slane %v1739, %v1861
    %v1863 = vsel %vm1370, %v1862, %v1858
    %v1864 = vlaneseq
    %v1865 = vshrl.u32 %v1864, 7
    %v1866 = vsub.s32 %v1346, %v1865
    %v1867 = vrot.slane %v1742, %v1866
    %v1868 = vlaneseq
    %v1869 = vshrl.u32 %v1868, 7
    %v1870 = vsub.s32 %v1351, %v1869
    %v1871 = vrot.slane %v1745, %v1870
    %v1872 = vsel %vm1356, %v1871, %v1867
    %v1873 = vlaneseq
    %v1874 = vshrl.u32 %v1873, 7
    %v1875 = vsub.s32 %v1358, %v1874
    %v1876 = vrot.slane %v1748, %v1875
    %v1877 = vsel %vm1363, %v1876, %v1872
    %v1878 = vlaneseq
    %v1879 = vshrl.u32 %v1878, 7
    %v1880 = vsub.s32 %v1365, %v1879
    %v1881 = vrot.slane %v1751, %v1880
    %v1882 = vsel %vm1370, %v1881, %v1877
    %v1883 = vlaneseq
    %v1884 = vshrl.u32 %v1883, 7
    %v1885 = vsub.s32 %v1346, %v1884
    %v1886 = vrot.slane %v1754, %v1885
    %v1887 = vlaneseq
    %v1888 = vshrl.u32 %v1887, 7
    %v1889 = vsub.s32 %v1351, %v1888
    %v1890 = vrot.slane %v1757, %v1889
    %v1891 = vsel %vm1356, %v1890, %v1886
    %v1892 = vlaneseq
    %v1893 = vshrl.u32 %v1892, 7
    %v1894 = vsub.s32 %v1358, %v1893
    %v1895 = vrot.slane %v1760, %v1894
    %v1896 = vsel %vm1363, %v1895, %v1891
    %v1897 = vlaneseq
    %v1898 = vshrl.u32 %v1897, 7
    %v1899 = vsub.s32 %v1365, %v1898
    %v1900 = vrot.slane %v1763, %v1899
    %v1901 = vsel %vm1370, %v1900, %v1896
    %v1902 = vlaneseq
    %v1903 = vshrl.u32 %v1902, 7
    %v1904 = vsub.s32 %v1346, %v1903
    %v1905 = vrot.slane %v1766, %v1904
    %v1906 = vlaneseq
    %v1907 = vshrl.u32 %v1906, 7
    %v1908 = vsub.s32 %v1351, %v1907
    %v1909 = vrot.slane %v1769, %v1908
    %v1910 = vsel %vm1356, %v1909, %v1905
    %v1911 = vlaneseq
    %v1912 = vshrl.u32 %v1911, 7
    %v1913 = vsub.s32 %v1358, %v1912
    %v1914 = vrot.slane %v1772, %v1913
    %v1915 = vsel %vm1363, %v1914, %v1910
    %v1916 = vlaneseq
    %v1917 = vshrl.u32 %v1916, 7
    %v1918 = vsub.s32 %v1365, %v1917
    %v1919 = vrot.slane %v1775, %v1918
    %v1920 = vsel %vm1370, %v1919, %v1915
    %v1921 = vlaneseq
    %v1922 = vshrl.u32 %v1921, 7
    %v1923 = vsub.s32 %v1346, %v1922
    %v1924 = vrot.slane %v1778, %v1923
    %v1925 = vlaneseq
    %v1926 = vshrl.u32 %v1925, 7
    %v1927 = vsub.s32 %v1351, %v1926
    %v1928 = vrot.slane %v1781, %v1927
    %v1929 = vsel %vm1356, %v1928, %v1924
    %v1930 = vlaneseq
    %v1931 = vshrl.u32 %v1930, 7
    %v1932 = vsub.s32 %v1358, %v1931
    %v1933 = vrot.slane %v1784, %v1932
    %v1934 = vsel %vm1363, %v1933, %v1929
    %v1935 = vlaneseq
    %v1936 = vshrl.u32 %v1935, 7
    %v1937 = vsub.s32 %v1365, %v1936
    %v1938 = vrot.slane %v1787, %v1937
    %v1939 = vsel %vm1370, %v1938, %v1934
    %v1940 = vsel %vm1505, %v1825, %v1806
    %v1941 = vsel %vm1507, %v1844, %v1940
    %v1942 = vsel %vm1509, %v1863, %v1941
    %v1943 = vsel %vm1511, %v1882, %v1942
    %v1944 = vsel %vm1513, %v1901, %v1943
    %v1945 = vsel %vm1515, %v1920, %v1944
    %v1946 = vsel %vm1517, %v1939, %v1945
    %v1948 = vsel %vm432, %v1946, 0.0
    %1949 = vadd.xlane.f32.xlu0 %v1948
    %v1950 = vpop.xlane.xlu0 %1949
    %v1952 = vlaneseq
    %v1953 = vshrl.u32 %v1952, 7
    %v1954 = vsub.s32 0, %v1953
    %v1955 = vrot.slane %v1950, %v1954
    %v1956 = vlaneseq
    %v1957 = vshrl.u32 %v1956, 7
    %v1958 = vsub.s32 1, %v1957
    %v1959 = vrot.slane %v1950, %v1958
    %v1960 = vlaneseq
    %v1961 = vshrl.u32 %v1960, 7
    %v1962 = vsub.s32 2, %v1961
    %v1963 = vrot.slane %v1950, %v1962
    %v1964 = vlaneseq
    %v1965 = vshrl.u32 %v1964, 7
    %v1966 = vsub.s32 3, %v1965
    %v1967 = vrot.slane %v1950, %v1966
    %v1968 = vlaneseq
    %v1969 = vshrl.u32 %v1968, 7
    %v1970 = vsub.s32 4, %v1969
    %v1971 = vrot.slane %v1950, %v1970
    %v1972 = vlaneseq
    %v1973 = vshrl.u32 %v1972, 7
    %v1974 = vsub.s32 5, %v1973
    %v1975 = vrot.slane %v1950, %v1974
    %v1976 = vlaneseq
    %v1977 = vshrl.u32 %v1976, 7
    %v1978 = vsub.s32 6, %v1977
    %v1979 = vrot.slane %v1950, %v1978
    %v1980 = vlaneseq
    %v1981 = vshrl.u32 %v1980, 7
    %v1982 = vsub.s32 7, %v1981
    %v1983 = vrot.slane %v1950, %v1982
    %v1992 = vrcp.pop %v1955
    %v1993 = vmul.f32 %v1597, %v1992
    %v1994 = vmul.f32 %v1599, %v1992
    %v1995 = vmul.f32 %v1601, %v1992
    %v1996 = vmul.f32 %v1603, %v1992
    %v1997 = vrcp.pop %v1959
    %v1998 = vmul.f32 %v1605, %v1997
    %v1999 = vmul.f32 %v1607, %v1997
    %v2000 = vmul.f32 %v1609, %v1997
    %v2001 = vmul.f32 %v1611, %v1997
    %v2002 = vrcp.pop %v1963
    %v2003 = vmul.f32 %v1613, %v2002
    %v2004 = vmul.f32 %v1615, %v2002
    %v2005 = vmul.f32 %v1617, %v2002
    %v2006 = vmul.f32 %v1619, %v2002
    %v2007 = vrcp.pop %v1967
    %v2008 = vmul.f32 %v1621, %v2007
    %v2009 = vmul.f32 %v1623, %v2007
    %v2010 = vmul.f32 %v1625, %v2007
    %v2011 = vmul.f32 %v1627, %v2007
    %v2012 = vrcp.pop %v1971
    %v2013 = vmul.f32 %v1629, %v2012
    %v2014 = vmul.f32 %v1631, %v2012
    %v2015 = vmul.f32 %v1633, %v2012
    %v2016 = vmul.f32 %v1635, %v2012
    %v2017 = vrcp.pop %v1975
    %v2018 = vmul.f32 %v1637, %v2017
    %v2019 = vmul.f32 %v1639, %v2017
    %v2020 = vmul.f32 %v1641, %v2017
    %v2021 = vmul.f32 %v1643, %v2017
    %v2022 = vrcp.pop %v1979
    %v2023 = vmul.f32 %v1645, %v2022
    %v2024 = vmul.f32 %v1647, %v2022
    %v2025 = vmul.f32 %v1649, %v2022
    %v2026 = vmul.f32 %v1651, %v2022
    %v2027 = vrcp.pop %v1983
    %v2028 = vmul.f32 %v1653, %v2027
    %v2029 = vmul.f32 %v1655, %v2027
    %v2030 = vmul.f32 %v1657, %v2027
    %v2031 = vmul.f32 %v1659, %v2027
    %2033 = vset.pattern.permute.xlu0 0
    %2034 = vperm.xlu0 %2033, %v1993
    %v2035 = vpop.permute.xlu0 %2034
    %2038 = vset.pattern.permute.xlu0 0
    %2039 = vperm.xlu0 %2038, %v1994
    %v2040 = vpop.permute.xlu0 %2039
    %2043 = vset.pattern.permute.xlu0 0
    %2044 = vperm.xlu0 %2043, %v1995
    %v2045 = vpop.permute.xlu0 %2044
    %2048 = vset.pattern.permute.xlu0 0
    %2049 = vperm.xlu0 %2048, %v1996
    %v2050 = vpop.permute.xlu0 %2049
    %2053 = vset.pattern.permute.xlu0 0
    %2054 = vperm.xlu0 %2053, %v1998
    %v2055 = vpop.permute.xlu0 %2054
    %2058 = vset.pattern.permute.xlu0 0
    %2059 = vperm.xlu0 %2058, %v1999
    %v2060 = vpop.permute.xlu0 %2059
    %2063 = vset.pattern.permute.xlu0 0
    %2064 = vperm.xlu0 %2063, %v2000
    %v2065 = vpop.permute.xlu0 %2064
    %2068 = vset.pattern.permute.xlu0 0
    %2069 = vperm.xlu0 %2068, %v2001
    %v2070 = vpop.permute.xlu0 %2069
    %2073 = vset.pattern.permute.xlu0 0
    %2074 = vperm.xlu0 %2073, %v2003
    %v2075 = vpop.permute.xlu0 %2074
    %2078 = vset.pattern.permute.xlu0 0
    %2079 = vperm.xlu0 %2078, %v2004
    %v2080 = vpop.permute.xlu0 %2079
    %2083 = vset.pattern.permute.xlu0 0
    %2084 = vperm.xlu0 %2083, %v2005
    %v2085 = vpop.permute.xlu0 %2084
    %2088 = vset.pattern.permute.xlu0 0
    %2089 = vperm.xlu0 %2088, %v2006
    %v2090 = vpop.permute.xlu0 %2089
    %2093 = vset.pattern.permute.xlu0 0
    %2094 = vperm.xlu0 %2093, %v2008
    %v2095 = vpop.permute.xlu0 %2094
    %2098 = vset.pattern.permute.xlu0 0
    %2099 = vperm.xlu0 %2098, %v2009
    %v2100 = vpop.permute.xlu0 %2099
    %2103 = vset.pattern.permute.xlu0 0
    %2104 = vperm.xlu0 %2103, %v2010
    %v2105 = vpop.permute.xlu0 %2104
    %2108 = vset.pattern.permute.xlu0 0
    %2109 = vperm.xlu0 %2108, %v2011
    %v2110 = vpop.permute.xlu0 %2109
    %2113 = vset.pattern.permute.xlu0 0
    %2114 = vperm.xlu0 %2113, %v2013
    %v2115 = vpop.permute.xlu0 %2114
    %2118 = vset.pattern.permute.xlu0 0
    %2119 = vperm.xlu0 %2118, %v2014
    %v2120 = vpop.permute.xlu0 %2119
    %2123 = vset.pattern.permute.xlu0 0
    %2124 = vperm.xlu0 %2123, %v2015
    %v2125 = vpop.permute.xlu0 %2124
    %2128 = vset.pattern.permute.xlu0 0
    %2129 = vperm.xlu0 %2128, %v2016
    %v2130 = vpop.permute.xlu0 %2129
    %2133 = vset.pattern.permute.xlu0 0
    %2134 = vperm.xlu0 %2133, %v2018
    %v2135 = vpop.permute.xlu0 %2134
    %2138 = vset.pattern.permute.xlu0 0
    %2139 = vperm.xlu0 %2138, %v2019
    %v2140 = vpop.permute.xlu0 %2139
    %2143 = vset.pattern.permute.xlu0 0
    %2144 = vperm.xlu0 %2143, %v2020
    %v2145 = vpop.permute.xlu0 %2144
    %2148 = vset.pattern.permute.xlu0 0
    %2149 = vperm.xlu0 %2148, %v2021
    %v2150 = vpop.permute.xlu0 %2149
    %2153 = vset.pattern.permute.xlu0 0
    %2154 = vperm.xlu0 %2153, %v2023
    %v2155 = vpop.permute.xlu0 %2154
    %2158 = vset.pattern.permute.xlu0 0
    %2159 = vperm.xlu0 %2158, %v2024
    %v2160 = vpop.permute.xlu0 %2159
    %2163 = vset.pattern.permute.xlu0 0
    %2164 = vperm.xlu0 %2163, %v2025
    %v2165 = vpop.permute.xlu0 %2164
    %2168 = vset.pattern.permute.xlu0 0
    %2169 = vperm.xlu0 %2168, %v2026
    %v2170 = vpop.permute.xlu0 %2169
    %2173 = vset.pattern.permute.xlu0 0
    %2174 = vperm.xlu0 %2173, %v2028
    %v2175 = vpop.permute.xlu0 %2174
    %2178 = vset.pattern.permute.xlu0 0
    %2179 = vperm.xlu0 %2178, %v2029
    %v2180 = vpop.permute.xlu0 %2179
    %2183 = vset.pattern.permute.xlu0 0
    %2184 = vperm.xlu0 %2183, %v2030
    %v2185 = vpop.permute.xlu0 %2184
    %2188 = vset.pattern.permute.xlu0 0
    %2189 = vperm.xlu0 %2188, %v2031
    %v2190 = vpop.permute.xlu0 %2189
    %v2192 = vmul.f32 %v1112, %v2035
    %v2193 = vmul.f32 %v1113, %v2040
    %v2194 = vmul.f32 %v1114, %v2045
    %v2195 = vmul.f32 %v1115, %v2050
    %v2196 = vmul.f32 %v1116, %v2055
    %v2197 = vmul.f32 %v1117, %v2060
    %v2198 = vmul.f32 %v1118, %v2065
    %v2199 = vmul.f32 %v1119, %v2070
    %v2200 = vmul.f32 %v1120, %v2075
    %v2201 = vmul.f32 %v1121, %v2080
    %v2202 = vmul.f32 %v1122, %v2085
    %v2203 = vmul.f32 %v1123, %v2090
    %v2204 = vmul.f32 %v1124, %v2095
    %v2205 = vmul.f32 %v1125, %v2100
    %v2206 = vmul.f32 %v1126, %v2105
    %v2207 = vmul.f32 %v1127, %v2110
    %v2208 = vmul.f32 %v1128, %v2115
    %v2209 = vmul.f32 %v1129, %v2120
    %v2210 = vmul.f32 %v1130, %v2125
    %v2211 = vmul.f32 %v1131, %v2130
    %v2212 = vmul.f32 %v1132, %v2135
    %v2213 = vmul.f32 %v1133, %v2140
    %v2214 = vmul.f32 %v1134, %v2145
    %v2215 = vmul.f32 %v1135, %v2150
    %v2216 = vmul.f32 %v1136, %v2155
    %v2217 = vmul.f32 %v1137, %v2160
    %v2218 = vmul.f32 %v1138, %v2165
    %v2219 = vmul.f32 %v1139, %v2170
    %v2220 = vmul.f32 %v1140, %v2175
    %v2221 = vmul.f32 %v1141, %v2180
    %v2222 = vmul.f32 %v1142, %v2185
    %v2223 = vmul.f32 %v1143, %v2190
    %v2224 = vsel %vm1180, %v2192, 0.0
    %v2225 = vsel %vm1180, %v2193, 0.0
    %v2226 = vadd.f32 %v2224, %v2225
    %v2227 = vsel %vm1180, %v2194, 0.0
    %v2228 = vadd.f32 %v2226, %v2227
    %v2229 = vsel %vm1180, %v2195, 0.0
    %v2230 = vadd.f32 %v2228, %v2229
    %v2231 = vrot.slane %v2230, 4
    %v2232 = vadd.f32 %v2230, %v2231
    %v2233 = vrot.slane %v2232, 2
    %v2234 = vadd.f32 %v2232, %v2233
    %v2235 = vrot.slane %v2234, 1
    %v2236 = vadd.f32 %v2234, %v2235
    %v2237 = vsel %vm1180, %v2196, 0.0
    %v2238 = vsel %vm1180, %v2197, 0.0
    %v2239 = vadd.f32 %v2237, %v2238
    %v2240 = vsel %vm1180, %v2198, 0.0
    %v2241 = vadd.f32 %v2239, %v2240
    %v2242 = vsel %vm1180, %v2199, 0.0
    %v2243 = vadd.f32 %v2241, %v2242
    %v2244 = vrot.slane %v2243, 4
    %v2245 = vadd.f32 %v2243, %v2244
    %v2246 = vrot.slane %v2245, 2
    %v2247 = vadd.f32 %v2245, %v2246
    %v2248 = vrot.slane %v2247, 1
    %v2249 = vadd.f32 %v2247, %v2248
    %v2250 = vsel %vm1180, %v2200, 0.0
    %v2251 = vsel %vm1180, %v2201, 0.0
    %v2252 = vadd.f32 %v2250, %v2251
    %v2253 = vsel %vm1180, %v2202, 0.0
    %v2254 = vadd.f32 %v2252, %v2253
    %v2255 = vsel %vm1180, %v2203, 0.0
    %v2256 = vadd.f32 %v2254, %v2255
    %v2257 = vrot.slane %v2256, 4
    %v2258 = vadd.f32 %v2256, %v2257
    %v2259 = vrot.slane %v2258, 2
    %v2260 = vadd.f32 %v2258, %v2259
    %v2261 = vrot.slane %v2260, 1
    %v2262 = vadd.f32 %v2260, %v2261
    %v2263 = vsel %vm1180, %v2204, 0.0
    %v2264 = vsel %vm1180, %v2205, 0.0
    %v2265 = vadd.f32 %v2263, %v2264
    %v2266 = vsel %vm1180, %v2206, 0.0
    %v2267 = vadd.f32 %v2265, %v2266
    %v2268 = vsel %vm1180, %v2207, 0.0
    %v2269 = vadd.f32 %v2267, %v2268
    %v2270 = vrot.slane %v2269, 4
    %v2271 = vadd.f32 %v2269, %v2270
    %v2272 = vrot.slane %v2271, 2
    %v2273 = vadd.f32 %v2271, %v2272
    %v2274 = vrot.slane %v2273, 1
    %v2275 = vadd.f32 %v2273, %v2274
    %v2276 = vsel %vm1180, %v2208, 0.0
    %v2277 = vsel %vm1180, %v2209, 0.0
    %v2278 = vadd.f32 %v2276, %v2277
    %v2279 = vsel %vm1180, %v2210, 0.0
    %v2280 = vadd.f32 %v2278, %v2279
    %v2281 = vsel %vm1180, %v2211, 0.0
    %v2282 = vadd.f32 %v2280, %v2281
    %v2283 = vrot.slane %v2282, 4
    %v2284 = vadd.f32 %v2282, %v2283
    %v2285 = vrot.slane %v2284, 2
    %v2286 = vadd.f32 %v2284, %v2285
    %v2287 = vrot.slane %v2286, 1
    %v2288 = vadd.f32 %v2286, %v2287
    %v2289 = vsel %vm1180, %v2212, 0.0
    %v2290 = vsel %vm1180, %v2213, 0.0
    %v2291 = vadd.f32 %v2289, %v2290
    %v2292 = vsel %vm1180, %v2214, 0.0
    %v2293 = vadd.f32 %v2291, %v2292
    %v2294 = vsel %vm1180, %v2215, 0.0
    %v2295 = vadd.f32 %v2293, %v2294
    %v2296 = vrot.slane %v2295, 4
    %v2297 = vadd.f32 %v2295, %v2296
    %v2298 = vrot.slane %v2297, 2
    %v2299 = vadd.f32 %v2297, %v2298
    %v2300 = vrot.slane %v2299, 1
    %v2301 = vadd.f32 %v2299, %v2300
    %v2302 = vsel %vm1180, %v2216, 0.0
    %v2303 = vsel %vm1180, %v2217, 0.0
    %v2304 = vadd.f32 %v2302, %v2303
    %v2305 = vsel %vm1180, %v2218, 0.0
    %v2306 = vadd.f32 %v2304, %v2305
    %v2307 = vsel %vm1180, %v2219, 0.0
    %v2308 = vadd.f32 %v2306, %v2307
    %v2309 = vrot.slane %v2308, 4
    %v2310 = vadd.f32 %v2308, %v2309
    %v2311 = vrot.slane %v2310, 2
    %v2312 = vadd.f32 %v2310, %v2311
    %v2313 = vrot.slane %v2312, 1
    %v2314 = vadd.f32 %v2312, %v2313
    %v2315 = vsel %vm1180, %v2220, 0.0
    %v2316 = vsel %vm1180, %v2221, 0.0
    %v2317 = vadd.f32 %v2315, %v2316
    %v2318 = vsel %vm1180, %v2222, 0.0
    %v2319 = vadd.f32 %v2317, %v2318
    %v2320 = vsel %vm1180, %v2223, 0.0
    %v2321 = vadd.f32 %v2319, %v2320
    %v2322 = vrot.slane %v2321, 4
    %v2323 = vadd.f32 %v2321, %v2322
    %v2324 = vrot.slane %v2323, 2
    %v2325 = vadd.f32 %v2323, %v2324
    %v2326 = vrot.slane %v2325, 1
    %v2327 = vadd.f32 %v2325, %v2326
    %v2336 = vsel %vm1505, %v2249, %v2236
    %v2337 = vsel %vm1507, %v2262, %v2336
    %v2338 = vsel %vm1509, %v2275, %v2337
    %v2339 = vsel %vm1511, %v2288, %v2338
    %v2340 = vsel %vm1513, %v2301, %v2339
    %v2341 = vsel %vm1515, %v2314, %v2340
    %v2342 = vsel %vm1517, %v2327, %v2341
    %2344 = vst.msk [vmem:[#allocation2] sm:$0xff] %vm1180, %v2342
    %v2345 = vlaneseq
    %v2346 = vshrl.u32 %v2345, 7
    %v2347 = vsub.s32 %v1346, %v2346
    %v2348 = vrot.slane %v2035, %v2347
    %v2349 = vlaneseq
    %v2350 = vshrl.u32 %v2349, 7
    %v2351 = vsub.s32 %v1351, %v2350
    %v2352 = vrot.slane %v2040, %v2351
    %v2353 = vsel %vm1356, %v2352, %v2348
    %v2354 = vlaneseq
    %v2355 = vshrl.u32 %v2354, 7
    %v2356 = vsub.s32 %v1358, %v2355
    %v2357 = vrot.slane %v2045, %v2356
    %v2358 = vsel %vm1363, %v2357, %v2353
    %v2359 = vlaneseq
    %v2360 = vshrl.u32 %v2359, 7
    %v2361 = vsub.s32 %v1365, %v2360
    %v2362 = vrot.slane %v2050, %v2361
    %v2363 = vsel %vm1370, %v2362, %v2358
    %v2364 = vlaneseq
    %v2365 = vshrl.u32 %v2364, 7
    %v2366 = vsub.s32 %v1346, %v2365
    %v2367 = vrot.slane %v2055, %v2366
    %v2368 = vlaneseq
    %v2369 = vshrl.u32 %v2368, 7
    %v2370 = vsub.s32 %v1351, %v2369
    %v2371 = vrot.slane %v2060, %v2370
    %v2372 = vsel %vm1356, %v2371, %v2367
    %v2373 = vlaneseq
    %v2374 = vshrl.u32 %v2373, 7
    %v2375 = vsub.s32 %v1358, %v2374
    %v2376 = vrot.slane %v2065, %v2375
    %v2377 = vsel %vm1363, %v2376, %v2372
    %v2378 = vlaneseq
    %v2379 = vshrl.u32 %v2378, 7
    %v2380 = vsub.s32 %v1365, %v2379
    %v2381 = vrot.slane %v2070, %v2380
    %v2382 = vsel %vm1370, %v2381, %v2377
    %v2383 = vlaneseq
    %v2384 = vshrl.u32 %v2383, 7
    %v2385 = vsub.s32 %v1346, %v2384
    %v2386 = vrot.slane %v2075, %v2385
    %v2387 = vlaneseq
    %v2388 = vshrl.u32 %v2387, 7
    %v2389 = vsub.s32 %v1351, %v2388
    %v2390 = vrot.slane %v2080, %v2389
    %v2391 = vsel %vm1356, %v2390, %v2386
    %v2392 = vlaneseq
    %v2393 = vshrl.u32 %v2392, 7
    %v2394 = vsub.s32 %v1358, %v2393
    %v2395 = vrot.slane %v2085, %v2394
    %v2396 = vsel %vm1363, %v2395, %v2391
    %v2397 = vlaneseq
    %v2398 = vshrl.u32 %v2397, 7
    %v2399 = vsub.s32 %v1365, %v2398
    %v2400 = vrot.slane %v2090, %v2399
    %v2401 = vsel %vm1370, %v2400, %v2396
    %v2402 = vlaneseq
    %v2403 = vshrl.u32 %v2402, 7
    %v2404 = vsub.s32 %v1346, %v2403
    %v2405 = vrot.slane %v2095, %v2404
    %v2406 = vlaneseq
    %v2407 = vshrl.u32 %v2406, 7
    %v2408 = vsub.s32 %v1351, %v2407
    %v2409 = vrot.slane %v2100, %v2408
    %v2410 = vsel %vm1356, %v2409, %v2405
    %v2411 = vlaneseq
    %v2412 = vshrl.u32 %v2411, 7
    %v2413 = vsub.s32 %v1358, %v2412
    %v2414 = vrot.slane %v2105, %v2413
    %v2415 = vsel %vm1363, %v2414, %v2410
    %v2416 = vlaneseq
    %v2417 = vshrl.u32 %v2416, 7
    %v2418 = vsub.s32 %v1365, %v2417
    %v2419 = vrot.slane %v2110, %v2418
    %v2420 = vsel %vm1370, %v2419, %v2415
    %v2421 = vlaneseq
    %v2422 = vshrl.u32 %v2421, 7
    %v2423 = vsub.s32 %v1346, %v2422
    %v2424 = vrot.slane %v2115, %v2423
    %v2425 = vlaneseq
    %v2426 = vshrl.u32 %v2425, 7
    %v2427 = vsub.s32 %v1351, %v2426
    %v2428 = vrot.slane %v2120, %v2427
    %v2429 = vsel %vm1356, %v2428, %v2424
    %v2430 = vlaneseq
    %v2431 = vshrl.u32 %v2430, 7
    %v2432 = vsub.s32 %v1358, %v2431
    %v2433 = vrot.slane %v2125, %v2432
    %v2434 = vsel %vm1363, %v2433, %v2429
    %v2435 = vlaneseq
    %v2436 = vshrl.u32 %v2435, 7
    %v2437 = vsub.s32 %v1365, %v2436
    %v2438 = vrot.slane %v2130, %v2437
    %v2439 = vsel %vm1370, %v2438, %v2434
    %v2440 = vlaneseq
    %v2441 = vshrl.u32 %v2440, 7
    %v2442 = vsub.s32 %v1346, %v2441
    %v2443 = vrot.slane %v2135, %v2442
    %v2444 = vlaneseq
    %v2445 = vshrl.u32 %v2444, 7
    %v2446 = vsub.s32 %v1351, %v2445
    %v2447 = vrot.slane %v2140, %v2446
    %v2448 = vsel %vm1356, %v2447, %v2443
    %v2449 = vlaneseq
    %v2450 = vshrl.u32 %v2449, 7
    %v2451 = vsub.s32 %v1358, %v2450
    %v2452 = vrot.slane %v2145, %v2451
    %v2453 = vsel %vm1363, %v2452, %v2448
    %v2454 = vlaneseq
    %v2455 = vshrl.u32 %v2454, 7
    %v2456 = vsub.s32 %v1365, %v2455
    %v2457 = vrot.slane %v2150, %v2456
    %v2458 = vsel %vm1370, %v2457, %v2453
    %v2459 = vlaneseq
    %v2460 = vshrl.u32 %v2459, 7
    %v2461 = vsub.s32 %v1346, %v2460
    %v2462 = vrot.slane %v2155, %v2461
    %v2463 = vlaneseq
    %v2464 = vshrl.u32 %v2463, 7
    %v2465 = vsub.s32 %v1351, %v2464
    %v2466 = vrot.slane %v2160, %v2465
    %v2467 = vsel %vm1356, %v2466, %v2462
    %v2468 = vlaneseq
    %v2469 = vshrl.u32 %v2468, 7
    %v2470 = vsub.s32 %v1358, %v2469
    %v2471 = vrot.slane %v2165, %v2470
    %v2472 = vsel %vm1363, %v2471, %v2467
    %v2473 = vlaneseq
    %v2474 = vshrl.u32 %v2473, 7
    %v2475 = vsub.s32 %v1365, %v2474
    %v2476 = vrot.slane %v2170, %v2475
    %v2477 = vsel %vm1370, %v2476, %v2472
    %v2478 = vlaneseq
    %v2479 = vshrl.u32 %v2478, 7
    %v2480 = vsub.s32 %v1346, %v2479
    %v2481 = vrot.slane %v2175, %v2480
    %v2482 = vlaneseq
    %v2483 = vshrl.u32 %v2482, 7
    %v2484 = vsub.s32 %v1351, %v2483
    %v2485 = vrot.slane %v2180, %v2484
    %v2486 = vsel %vm1356, %v2485, %v2481
    %v2487 = vlaneseq
    %v2488 = vshrl.u32 %v2487, 7
    %v2489 = vsub.s32 %v1358, %v2488
    %v2490 = vrot.slane %v2185, %v2489
    %v2491 = vsel %vm1363, %v2490, %v2486
    %v2492 = vlaneseq
    %v2493 = vshrl.u32 %v2492, 7
    %v2494 = vsub.s32 %v1365, %v2493
    %v2495 = vrot.slane %v2190, %v2494
    %v2496 = vsel %vm1370, %v2495, %v2491
    %v2497 = vsel %vm1505, %v2382, %v2363
    %v2498 = vsel %vm1507, %v2401, %v2497
    %v2499 = vsel %vm1509, %v2420, %v2498
    %v2500 = vsel %vm1511, %v2439, %v2499
    %v2501 = vsel %vm1513, %v2458, %v2500
    %v2502 = vsel %vm1515, %v2477, %v2501
    %v2503 = vsel %vm1517, %v2496, %v2502
    %2505 = vst.msk [vmem:[#allocation4] sm:$0xff] %vm432, %v2503
    // Predicated region
    $region10: #{tpu_custom_call.1} parent=1 // pred_check
      _
    $region11: #{tpu_custom_call.1} parent=1 // pred_check_branch
      %2507 = sbr.rel (0) target = $region13
    $region12: #{tpu_custom_call.1} parent=1 // pred_region
      %s2509 = ssub.s32 128, 128
      %2510 = vsyncadd [#allocation3], %s2509
      %s2512 = sshll.u32 [#allocation2], 4
      %s2513 = int_to_ptr.vmem [resolvable:$true] %s2512
      %2515 = dma.vmem_to_hbm [thread:$0]  %s2513, 128, %s2, [#allocation3]
    $region13: #{tpu_custom_call.1} parent=1 // pred_fallthru
      _
    // Predicated region
    $region14: #{tpu_custom_call.1} parent=1 // pred_check
      _
    $region15: #{tpu_custom_call.1} parent=1 // pred_check_branch
      %2517 = sbr.rel (0) target = $region17
    $region16: #{tpu_custom_call.1} parent=1 // pred_region
      %s2519 = ssub.s32 128, 128
      %2520 = vsyncadd [#allocation5], %s2519
      %s2522 = sshll.u32 [#allocation4], 4
      %s2523 = int_to_ptr.vmem [resolvable:$true] %s2522
      %2525 = dma.vmem_to_hbm [thread:$0]  %s2523, 128, %s3, [#allocation5]
    $region17: #{tpu_custom_call.1} parent=1 // pred_fallthru
      _
    // Predicated region
    $region18: #{tpu_custom_call.1} parent=1 // pred_check
      _
    $region19: #{tpu_custom_call.1} parent=1 // pred_check_branch
      %2527 = sbr.rel (0) target = $region21
    $region20: #{tpu_custom_call.1} parent=1 // pred_region
      %2528 = dma.done [#allocation3], 128
    $region21: #{tpu_custom_call.1} parent=1 // pred_fallthru
      _
    // Predicated region
    $region22: #{tpu_custom_call.1} parent=1 // pred_check
      _
    $region23: #{tpu_custom_call.1} parent=1 // pred_check_branch
      %2530 = sbr.rel (0) target = $region25
    $region24: #{tpu_custom_call.1} parent=1 // pred_region
      %2531 = dma.done [#allocation5], 128
    $region25: #{tpu_custom_call.1} parent=1 // pred_fallthru
      _
    %2532 = vsyncpa [#allocation3], 1
    %2533 = vsyncpa [#allocation5], 1

</llo_original>
